<compile_context>
chip_gen: v7x
topology: tpu7x:2x2x1
jax: 0.10.0
libtpu: 0.0.40
codegen_flags: <defaults>
</compile_context>

<pallas_src>
import functools

import jax
import jax.numpy as jnp
from jax.experimental import pallas as pl
from jax.experimental.pallas import tpu as pltpu


# --------------------------------------------------------------------------
# Fused Pallas kernel: one grid step == one batch element, full forward pass.
# --------------------------------------------------------------------------
def _shnet_fused_kernel(x_ref, mask_ref, w1_ref, b1_ref, w2_ref, b2_ref,
                        w3_ref, b3_ref, o_ref, *, W):
    """Refs:
      x_ref    (1, Cp, HW)  f32   lane-dense input image (channels padded)
      mask_ref (9, 1, HW)   f32   per-tap 'same'-padding border masks
      wN_ref   (Cout, 9*Cin) bf16 im2col-packed conv weights (tap-major cols)
      bN_ref   (Cout, 1)    f32   biases
      o_ref    (1, Cp, HW)  f32   img = conv3(h) + x
    """
    HW = x_ref.shape[-1]
    masks = [mask_ref[t] for t in range(9)]           # each (1, HW), loaded once

    def conv3x3(act, w_ref, b_ref, relu):
        # Build im2col LHS (9*C, HW): taps via lane-rotation + border mask.
        cols = []
        t = 0
        for dh in (-1, 0, 1):
            for dw in (-1, 0, 1):
                d = dh * W + dw                        # flat spatial offset
                if d == 0:
                    cols.append(act)                   # center tap: no roll/mask
                else:
                    shifted = pltpu.roll(act, shift=(-d) % HW, axis=1)
                    cols.append(shifted * masks[t])
                t += 1
        # f32 concat (8/32-row pieces -> sublane-aligned), then bf16 for MXU.
        lhs = jnp.concatenate(cols, axis=0).astype(jnp.bfloat16)   # (9*C, HW)
        acc = jnp.dot(w_ref[...], lhs,
                      preferred_element_type=jnp.float32)          # (Cout, HW)
        acc = acc + b_ref[...]                                     # (Cout,1) bcast
        return jnp.maximum(acc, 0.0) if relu else acc

    x = x_ref[0]                                          # (Cp, HW) f32
    h = conv3x3(x, w1_ref, b1_ref, relu=True)             # HourglassBlock conv 1
    h = conv3x3(h, w2_ref, b2_ref, relu=True)             # HourglassBlock conv 2 (grouped)
    img = conv3x3(h, w3_ref, b3_ref, relu=False) + x      # SAM conv2 + residual image
    o_ref[0] = img.astype(o_ref.dtype)


# --------------------------------------------------------------------------
# Host-side helpers
# --------------------------------------------------------------------------
def _make_tap_mask(H, W):
    """(9, 1, H*W) f32: validity mask of each 3x3 tap under 'same' zero-pad."""
    y, x = jnp.divmod(jnp.arange(H * W), W)
    masks = []
    for dh in (-1, 0, 1):
        for dw in (-1, 0, 1):
            valid = ((y + dh >= 0) & (y + dh < H) &
                     (x + dw >= 0) & (x + dw < W))
            masks.append(valid.astype(jnp.float32))
    return jnp.stack(masks, axis=0).reshape(9, 1, H * W)


def _pack_w(w, cin_pad=None, cout_pad=None):
    """HWIO (3,3,Cin,Cout) -> (Cout, 9*Cin) bf16, tap-major columns."""
    _, _, cin, cout = w.shape
    if cin_pad is not None and cin_pad > cin:
        w = jnp.pad(w, ((0, 0), (0, 0), (0, cin_pad - cin), (0, 0)))
        cin = cin_pad
    if cout_pad is not None and cout_pad > cout:
        w = jnp.pad(w, ((0, 0), (0, 0), (0, 0), (0, cout_pad - cout)))
        cout = cout_pad
    return jnp.transpose(w.reshape(9 * cin, cout)).astype(jnp.bfloat16)


# --------------------------------------------------------------------------
# SHNet forward (NCHW in, NCHW out) — one pallas_call for the whole network.
# --------------------------------------------------------------------------
def shnet_forward(x_nchw, params):
    B, Cin, H, W = x_nchw.shape
    HW = H * W
    F = params["hg_w1"].shape[-1]
    assert F % 8 == 0, "feature_num must be a multiple of 8"
    Cp = ((Cin + 7) // 8) * 8                      # pad img channels to sublane tile

    # NCHW -> lane-dense (B, Cp, H*W); zero-pad extra channels (exact, they
    # multiply zero weight columns and are sliced off at the end).
    x_flat = jnp.pad(x_nchw.reshape(B, Cin, HW), ((0, 0), (0, Cp - Cin), (0, 0)))

    w1 = _pack_w(params["hg_w1"], cin_pad=Cp)                  # (F, 9*Cp)
    b1 = params["hg_b1"].reshape(F, 1)
    w2 = _pack_w(params["hg_w2"])                              # (F, 9*F)
    b2 = params["hg_b2"].reshape(F, 1)
    w3 = _pack_w(params["sam_w2"], cout_pad=Cp)                # (Cp, 9*F)
    b3 = jnp.pad(params["sam_b2"], (0, Cp - Cin)).reshape(Cp, 1)

    tapmask = _make_tap_mask(H, W)                             # (9, 1, HW)

    kern = functools.partial(_shnet_fused_kernel, W=W)
    out = pl.pallas_call(
        kern,
        out_shape=jax.ShapeDtypeStruct((B, Cp, HW), x_nchw.dtype),
        grid=(B,),
        in_specs=[
            pl.BlockSpec((1, Cp, HW), lambda b: (b, 0, 0)),    # image
            pl.BlockSpec((9, 1, HW), lambda b: (0, 0, 0)),     # tap masks
            pl.BlockSpec(w1.shape, lambda b: (0, 0)),
            pl.BlockSpec(b1.shape, lambda b: (0, 0)),
            pl.BlockSpec(w2.shape, lambda b: (0, 0)),
            pl.BlockSpec(b2.shape, lambda b: (0, 0)),
            pl.BlockSpec(w3.shape, lambda b: (0, 0)),
            pl.BlockSpec(b3.shape, lambda b: (0, 0)),
        ],
        out_specs=pl.BlockSpec((1, Cp, HW), lambda b: (b, 0, 0)),
        compiler_params=pltpu.CompilerParams(
            dimension_semantics=("parallel",),                 # megacore over batch
            vmem_limit_bytes=32 * 1024 * 1024),
        # TODO(synk): at real SHNet resolutions add an H-tile grid axis with a
        # 1-row halo so per-block VMEM fits v7x's 64 MiB and feeds both TCs.
    )(x_flat, tapmask, w1, b1, w2, b2, w3, b3)

    return out[:, :Cin, :].reshape(B, Cin, H, W)               # block1_loss, NCHW


# --------------------------------------------------------------------------
# Deterministic parameter init (grouped conv == block-diagonal dense weight)
# --------------------------------------------------------------------------
def _group_mask(cin, cout, groups):
    ci = jnp.arange(cin)[:, None] // (cin // groups)
    co = jnp.arange(cout)[None, :] // (cout // groups)
    return (ci == co).astype(jnp.float32)


def init_conv(key, cin, cout, groups=1):
    kw, kb = jax.random.split(key)
    fan_in = 9 * (cin // groups)
    w = jax.random.normal(kw, (3, 3, cin, cout), jnp.float32) * (1.0 / fan_in) ** 0.5
    if groups > 1:
        w = w * _group_mask(cin, cout, groups)[None, None]
    b = jax.random.normal(kb, (cout,), jnp.float32) * 0.01
    return w, b


def init_shnet_params(key, in_channels, feature_num, groups):
    ks = jax.random.split(key, 3)
    p = {}
    # HourglassBlock (approximated): in_ch -> feat, then grouped feat -> feat.
    p["hg_w1"], p["hg_b1"] = init_conv(ks[0], in_channels, feature_num, groups=1)
    p["hg_w2"], p["hg_b2"] = init_conv(ks[1], feature_num, feature_num, groups=groups)
    # SAM branch that produces block1_loss: img = conv2(feat) + input.
    # (SAM's gate branch does not affect the returned value -> removed.)
    p["sam_w2"], p["sam_b2"] = init_conv(ks[2], feature_num, in_channels, groups=1)
    return p


# --------------------------------------------------------------------------
if __name__ == "__main__":
    B, IN_CH, H, W = 2, 4, 16, 16
    FEATURE_NUM, GROUPS = 32, 4

    key = jax.random.PRNGKey(0)
    kx, kp = jax.random.split(key)
    x = jax.random.normal(kx, (B, IN_CH, H, W), jnp.float32)      # NCHW input
    params = init_shnet_params(kp, IN_CH, FEATURE_NUM, GROUPS)

    out = jax.jit(shnet_forward)(x, params)
    jax.block_until_ready(out)
    assert out.shape == (B, IN_CH, H, W)
    print("KERNEL_OK")
</pallas_src>

<mosaic_0001>
module attributes {stable_mosaic.version = 11 : i64} {
  func.func @_shnet_fused_kernel(%arg0: i32, %arg1: memref<1x8x256xf32, #tpu.memory_space<vmem>>, %arg2: memref<9x1x256xf32, #tpu.memory_space<vmem>>, %arg3: memref<32x72xbf16, #tpu.memory_space<vmem>>, %arg4: memref<32x1xf32, #tpu.memory_space<vmem>>, %arg5: memref<32x288xbf16, #tpu.memory_space<vmem>>, %arg6: memref<32x1xf32, #tpu.memory_space<vmem>>, %arg7: memref<8x288xbf16, #tpu.memory_space<vmem>>, %arg8: memref<8x1xf32, #tpu.memory_space<vmem>>, %arg9: memref<1x8x256xf32, #tpu.memory_space<vmem>>) attributes {dimension_semantics = [#tpu.dimension_semantics<parallel>], iteration_bounds = array<i64: 2>, scalar_prefetch = 0 : i64, scratch_operands = 0 : i64, tpu.core_type = #tpu.core_type<tc>, window_params = [{transform_indices = @transform_0, window_bounds = array<i64: 1, 8, 256>}, {pipeline_mode = #tpu.pipeline_mode<synchronous>, transform_indices = @transform_1, window_bounds = array<i64: 9, 1, 256>}, {pipeline_mode = #tpu.pipeline_mode<synchronous>, transform_indices = @transform_2, window_bounds = array<i64: 32, 72>}, {pipeline_mode = #tpu.pipeline_mode<synchronous>, transform_indices = @transform_3, window_bounds = array<i64: 32, 1>}, {pipeline_mode = #tpu.pipeline_mode<synchronous>, transform_indices = @transform_4, window_bounds = array<i64: 32, 288>}, {pipeline_mode = #tpu.pipeline_mode<synchronous>, transform_indices = @transform_5, window_bounds = array<i64: 32, 1>}, {pipeline_mode = #tpu.pipeline_mode<synchronous>, transform_indices = @transform_6, window_bounds = array<i64: 8, 288>}, {pipeline_mode = #tpu.pipeline_mode<synchronous>, transform_indices = @transform_7, window_bounds = array<i64: 8, 1>}, {transform_indices = @transform_8, window_bounds = array<i64: 1, 8, 256>}]} {
    %c0 = arith.constant 0 : index
    %c0_0 = arith.constant 0 : index
    %c0_1 = arith.constant 0 : index
    %0 = vector.load %arg2[%c0, %c0_0, %c0_1] : memref<9x1x256xf32, #tpu.memory_space<vmem>>, vector<1x1x256xf32>
    %1 = vector.shape_cast %0 : vector<1x1x256xf32> to vector<1x256xf32>
    %c1 = arith.constant 1 : index
    %c0_2 = arith.constant 0 : index
    %c0_3 = arith.constant 0 : index
    %2 = vector.load %arg2[%c1, %c0_2, %c0_3] : memref<9x1x256xf32, #tpu.memory_space<vmem>>, vector<1x1x256xf32>
    %3 = vector.shape_cast %2 : vector<1x1x256xf32> to vector<1x256xf32>
    %c2 = arith.constant 2 : index
    %c0_4 = arith.constant 0 : index
    %c0_5 = arith.constant 0 : index
    %4 = vector.load %arg2[%c2, %c0_4, %c0_5] : memref<9x1x256xf32, #tpu.memory_space<vmem>>, vector<1x1x256xf32>
    %5 = vector.shape_cast %4 : vector<1x1x256xf32> to vector<1x256xf32>
    %c3 = arith.constant 3 : index
    %c0_6 = arith.constant 0 : index
    %c0_7 = arith.constant 0 : index
    %6 = vector.load %arg2[%c3, %c0_6, %c0_7] : memref<9x1x256xf32, #tpu.memory_space<vmem>>, vector<1x1x256xf32>
    %7 = vector.shape_cast %6 : vector<1x1x256xf32> to vector<1x256xf32>
    %c5 = arith.constant 5 : index
    %c0_8 = arith.constant 0 : index
    %c0_9 = arith.constant 0 : index
    %8 = vector.load %arg2[%c5, %c0_8, %c0_9] : memref<9x1x256xf32, #tpu.memory_space<vmem>>, vector<1x1x256xf32>
    %9 = vector.shape_cast %8 : vector<1x1x256xf32> to vector<1x256xf32>
    %c6 = arith.constant 6 : index
    %c0_10 = arith.constant 0 : index
    %c0_11 = arith.constant 0 : index
    %10 = vector.load %arg2[%c6, %c0_10, %c0_11] : memref<9x1x256xf32, #tpu.memory_space<vmem>>, vector<1x1x256xf32>
    %11 = vector.shape_cast %10 : vector<1x1x256xf32> to vector<1x256xf32>
    %c7 = arith.constant 7 : index
    %c0_12 = arith.constant 0 : index
    %c0_13 = arith.constant 0 : index
    %12 = vector.load %arg2[%c7, %c0_12, %c0_13] : memref<9x1x256xf32, #tpu.memory_space<vmem>>, vector<1x1x256xf32>
    %13 = vector.shape_cast %12 : vector<1x1x256xf32> to vector<1x256xf32>
    %c8 = arith.constant 8 : index
    %c0_14 = arith.constant 0 : index
    %c0_15 = arith.constant 0 : index
    %14 = vector.load %arg2[%c8, %c0_14, %c0_15] : memref<9x1x256xf32, #tpu.memory_space<vmem>>, vector<1x1x256xf32>
    %15 = vector.shape_cast %14 : vector<1x1x256xf32> to vector<1x256xf32>
    %c0_16 = arith.constant 0 : index
    %c0_17 = arith.constant 0 : index
    %c0_18 = arith.constant 0 : index
    %16 = vector.load %arg1[%c0_16, %c0_17, %c0_18] : memref<1x8x256xf32, #tpu.memory_space<vmem>>, vector<1x8x256xf32>
    %17 = vector.shape_cast %16 : vector<1x8x256xf32> to vector<8x256xf32>
    %c17_i32 = arith.constant 17 : i32
    %18 = tpu.dynamic_rotate %17 by %c17_i32 dim 1 : vector<8x256xf32>, i32 -> vector<8x256xf32>
    %19 = vector.broadcast %1 : vector<1x256xf32> to vector<8x256xf32>
    %20 = arith.mulf %18, %19 : vector<8x256xf32>
    %c16_i32 = arith.constant 16 : i32
    %21 = tpu.dynamic_rotate %17 by %c16_i32 dim 1 : vector<8x256xf32>, i32 -> vector<8x256xf32>
    %22 = vector.broadcast %3 : vector<1x256xf32> to vector<8x256xf32>
    %23 = arith.mulf %21, %22 : vector<8x256xf32>
    %c15_i32 = arith.constant 15 : i32
    %24 = tpu.dynamic_rotate %17 by %c15_i32 dim 1 : vector<8x256xf32>, i32 -> vector<8x256xf32>
    %25 = vector.broadcast %5 : vector<1x256xf32> to vector<8x256xf32>
    %26 = arith.mulf %24, %25 : vector<8x256xf32>
    %c1_i32 = arith.constant 1 : i32
    %27 = tpu.dynamic_rotate %17 by %c1_i32 dim 1 : vector<8x256xf32>, i32 -> vector<8x256xf32>
    %28 = vector.broadcast %7 : vector<1x256xf32> to vector<8x256xf32>
    %29 = arith.mulf %27, %28 : vector<8x256xf32>
    %c255_i32 = arith.constant 255 : i32
    %30 = tpu.dynamic_rotate %17 by %c255_i32 dim 1 : vector<8x256xf32>, i32 -> vector<8x256xf32>
    %31 = vector.broadcast %9 : vector<1x256xf32> to vector<8x256xf32>
    %32 = arith.mulf %30, %31 : vector<8x256xf32>
    %c241_i32 = arith.constant 241 : i32
    %33 = tpu.dynamic_rotate %17 by %c241_i32 dim 1 : vector<8x256xf32>, i32 -> vector<8x256xf32>
    %34 = vector.broadcast %11 : vector<1x256xf32> to vector<8x256xf32>
    %35 = arith.mulf %33, %34 : vector<8x256xf32>
    %c240_i32 = arith.constant 240 : i32
    %36 = tpu.dynamic_rotate %17 by %c240_i32 dim 1 : vector<8x256xf32>, i32 -> vector<8x256xf32>
    %37 = vector.broadcast %13 : vector<1x256xf32> to vector<8x256xf32>
    %38 = arith.mulf %36, %37 : vector<8x256xf32>
    %c239_i32 = arith.constant 239 : i32
    %39 = tpu.dynamic_rotate %17 by %c239_i32 dim 1 : vector<8x256xf32>, i32 -> vector<8x256xf32>
    %40 = vector.broadcast %15 : vector<1x256xf32> to vector<8x256xf32>
    %41 = arith.mulf %39, %40 : vector<8x256xf32>
    %42 = tpu.concatenate %20, %23, %26, %29, %17, %32, %35, %38, %41 in 0 : vector<8x256xf32>, vector<8x256xf32>, vector<8x256xf32>, vector<8x256xf32>, vector<8x256xf32>, vector<8x256xf32>, vector<8x256xf32>, vector<8x256xf32>, vector<8x256xf32> -> vector<72x256xf32>
    %43 = arith.truncf %42 : vector<72x256xf32> to vector<72x256xbf16>
    %c0_19 = arith.constant 0 : index
    %c0_20 = arith.constant 0 : index
    %44 = vector.load %arg3[%c0_19, %c0_20] : memref<32x72xbf16, #tpu.memory_space<vmem>>, vector<32x72xbf16>
    %cst = arith.constant dense<0.000000e+00> : vector<32x256xf32>
    %45 = tpu.matmul %44, %43, %cst {dimension_numbers = #tpu.dot_dimension_numbers<[1], [0], [0], [1], [0, 0, 1, 1], [], []>} : vector<32x72xbf16>, vector<72x256xbf16>, vector<32x256xf32> -> vector<32x256xf32>
    %c0_21 = arith.constant 0 : index
    %c0_22 = arith.constant 0 : index
    %46 = vector.load %arg4[%c0_21, %c0_22] : memref<32x1xf32, #tpu.memory_space<vmem>>, vector<32x1xf32>
    %47 = vector.broadcast %46 : vector<32x1xf32> to vector<32x256xf32>
    %48 = arith.addf %45, %47 : vector<32x256xf32>
    %cst_23 = arith.constant 0.000000e+00 : f32
    %49 = vector.broadcast %cst_23 : f32 to vector<32x256xf32>
    %50 = arith.maximumf %48, %49 : vector<32x256xf32>
    %c17_i32_24 = arith.constant 17 : i32
    %51 = tpu.dynamic_rotate %50 by %c17_i32_24 dim 1 : vector<32x256xf32>, i32 -> vector<32x256xf32>
    %52 = vector.broadcast %1 : vector<1x256xf32> to vector<32x256xf32>
    %53 = arith.mulf %51, %52 : vector<32x256xf32>
    %c16_i32_25 = arith.constant 16 : i32
    %54 = tpu.dynamic_rotate %50 by %c16_i32_25 dim 1 : vector<32x256xf32>, i32 -> vector<32x256xf32>
    %55 = vector.broadcast %3 : vector<1x256xf32> to vector<32x256xf32>
    %56 = arith.mulf %54, %55 : vector<32x256xf32>
    %c15_i32_26 = arith.constant 15 : i32
    %57 = tpu.dynamic_rotate %50 by %c15_i32_26 dim 1 : vector<32x256xf32>, i32 -> vector<32x256xf32>
    %58 = vector.broadcast %5 : vector<1x256xf32> to vector<32x256xf32>
    %59 = arith.mulf %57, %58 : vector<32x256xf32>
    %c1_i32_27 = arith.constant 1 : i32
    %60 = tpu.dynamic_rotate %50 by %c1_i32_27 dim 1 : vector<32x256xf32>, i32 -> vector<32x256xf32>
    %61 = vector.broadcast %7 : vector<1x256xf32> to vector<32x256xf32>
    %62 = arith.mulf %60, %61 : vector<32x256xf32>
    %c255_i32_28 = arith.constant 255 : i32
    %63 = tpu.dynamic_rotate %50 by %c255_i32_28 dim 1 : vector<32x256xf32>, i32 -> vector<32x256xf32>
    %64 = vector.broadcast %9 : vector<1x256xf32> to vector<32x256xf32>
    %65 = arith.mulf %63, %64 : vector<32x256xf32>
    %c241_i32_29 = arith.constant 241 : i32
    %66 = tpu.dynamic_rotate %50 by %c241_i32_29 dim 1 : vector<32x256xf32>, i32 -> vector<32x256xf32>
    %67 = vector.broadcast %11 : vector<1x256xf32> to vector<32x256xf32>
    %68 = arith.mulf %66, %67 : vector<32x256xf32>
    %c240_i32_30 = arith.constant 240 : i32
    %69 = tpu.dynamic_rotate %50 by %c240_i32_30 dim 1 : vector<32x256xf32>, i32 -> vector<32x256xf32>
    %70 = vector.broadcast %13 : vector<1x256xf32> to vector<32x256xf32>
    %71 = arith.mulf %69, %70 : vector<32x256xf32>
    %c239_i32_31 = arith.constant 239 : i32
    %72 = tpu.dynamic_rotate %50 by %c239_i32_31 dim 1 : vector<32x256xf32>, i32 -> vector<32x256xf32>
    %73 = vector.broadcast %15 : vector<1x256xf32> to vector<32x256xf32>
    %74 = arith.mulf %72, %73 : vector<32x256xf32>
    %75 = tpu.concatenate %53, %56, %59, %62, %50, %65, %68, %71, %74 in 0 : vector<32x256xf32>, vector<32x256xf32>, vector<32x256xf32>, vector<32x256xf32>, vector<32x256xf32>, vector<32x256xf32>, vector<32x256xf32>, vector<32x256xf32>, vector<32x256xf32> -> vector<288x256xf32>
    %76 = arith.truncf %75 : vector<288x256xf32> to vector<288x256xbf16>
    %c0_32 = arith.constant 0 : index
    %c0_33 = arith.constant 0 : index
    %77 = vector.load %arg5[%c0_32, %c0_33] : memref<32x288xbf16, #tpu.memory_space<vmem>>, vector<32x288xbf16>
    %cst_34 = arith.constant dense<0.000000e+00> : vector<32x256xf32>
    %78 = tpu.matmul %77, %76, %cst_34 {dimension_numbers = #tpu.dot_dimension_numbers<[1], [0], [0], [1], [0, 0, 1, 1], [], []>} : vector<32x288xbf16>, vector<288x256xbf16>, vector<32x256xf32> -> vector<32x256xf32>
    %c0_35 = arith.constant 0 : index
    %c0_36 = arith.constant 0 : index
    %79 = vector.load %arg6[%c0_35, %c0_36] : memref<32x1xf32, #tpu.memory_space<vmem>>, vector<32x1xf32>
    %80 = vector.broadcast %79 : vector<32x1xf32> to vector<32x256xf32>
    %81 = arith.addf %78, %80 : vector<32x256xf32>
    %cst_37 = arith.constant 0.000000e+00 : f32
    %82 = vector.broadcast %cst_37 : f32 to vector<32x256xf32>
    %83 = arith.maximumf %81, %82 : vector<32x256xf32>
    %c17_i32_38 = arith.constant 17 : i32
    %84 = tpu.dynamic_rotate %83 by %c17_i32_38 dim 1 : vector<32x256xf32>, i32 -> vector<32x256xf32>
    %85 = vector.broadcast %1 : vector<1x256xf32> to vector<32x256xf32>
    %86 = arith.mulf %84, %85 : vector<32x256xf32>
    %c16_i32_39 = arith.constant 16 : i32
    %87 = tpu.dynamic_rotate %83 by %c16_i32_39 dim 1 : vector<32x256xf32>, i32 -> vector<32x256xf32>
    %88 = vector.broadcast %3 : vector<1x256xf32> to vector<32x256xf32>
    %89 = arith.mulf %87, %88 : vector<32x256xf32>
    %c15_i32_40 = arith.constant 15 : i32
    %90 = tpu.dynamic_rotate %83 by %c15_i32_40 dim 1 : vector<32x256xf32>, i32 -> vector<32x256xf32>
    %91 = vector.broadcast %5 : vector<1x256xf32> to vector<32x256xf32>
    %92 = arith.mulf %90, %91 : vector<32x256xf32>
    %c1_i32_41 = arith.constant 1 : i32
    %93 = tpu.dynamic_rotate %83 by %c1_i32_41 dim 1 : vector<32x256xf32>, i32 -> vector<32x256xf32>
    %94 = vector.broadcast %7 : vector<1x256xf32> to vector<32x256xf32>
    %95 = arith.mulf %93, %94 : vector<32x256xf32>
    %c255_i32_42 = arith.constant 255 : i32
    %96 = tpu.dynamic_rotate %83 by %c255_i32_42 dim 1 : vector<32x256xf32>, i32 -> vector<32x256xf32>
    %97 = vector.broadcast %9 : vector<1x256xf32> to vector<32x256xf32>
    %98 = arith.mulf %96, %97 : vector<32x256xf32>
    %c241_i32_43 = arith.constant 241 : i32
    %99 = tpu.dynamic_rotate %83 by %c241_i32_43 dim 1 : vector<32x256xf32>, i32 -> vector<32x256xf32>
    %100 = vector.broadcast %11 : vector<1x256xf32> to vector<32x256xf32>
    %101 = arith.mulf %99, %100 : vector<32x256xf32>
    %c240_i32_44 = arith.constant 240 : i32
    %102 = tpu.dynamic_rotate %83 by %c240_i32_44 dim 1 : vector<32x256xf32>, i32 -> vector<32x256xf32>
    %103 = vector.broadcast %13 : vector<1x256xf32> to vector<32x256xf32>
    %104 = arith.mulf %102, %103 : vector<32x256xf32>
    %c239_i32_45 = arith.constant 239 : i32
    %105 = tpu.dynamic_rotate %83 by %c239_i32_45 dim 1 : vector<32x256xf32>, i32 -> vector<32x256xf32>
    %106 = vector.broadcast %15 : vector<1x256xf32> to vector<32x256xf32>
    %107 = arith.mulf %105, %106 : vector<32x256xf32>
    %108 = tpu.concatenate %86, %89, %92, %95, %83, %98, %101, %104, %107 in 0 : vector<32x256xf32>, vector<32x256xf32>, vector<32x256xf32>, vector<32x256xf32>, vector<32x256xf32>, vector<32x256xf32>, vector<32x256xf32>, vector<32x256xf32>, vector<32x256xf32> -> vector<288x256xf32>
    %109 = arith.truncf %108 : vector<288x256xf32> to vector<288x256xbf16>
    %c0_46 = arith.constant 0 : index
    %c0_47 = arith.constant 0 : index
    %110 = vector.load %arg7[%c0_46, %c0_47] : memref<8x288xbf16, #tpu.memory_space<vmem>>, vector<8x288xbf16>
    %cst_48 = arith.constant dense<0.000000e+00> : vector<8x256xf32>
    %111 = tpu.matmul %110, %109, %cst_48 {dimension_numbers = #tpu.dot_dimension_numbers<[1], [0], [0], [1], [0, 0, 1, 1], [], []>} : vector<8x288xbf16>, vector<288x256xbf16>, vector<8x256xf32> -> vector<8x256xf32>
    %c0_49 = arith.constant 0 : index
    %c0_50 = arith.constant 0 : index
    %112 = vector.load %arg8[%c0_49, %c0_50] : memref<8x1xf32, #tpu.memory_space<vmem>>, vector<8x1xf32>
    %113 = vector.broadcast %112 : vector<8x1xf32> to vector<8x256xf32>
    %114 = arith.addf %111, %113 : vector<8x256xf32>
    %115 = arith.addf %114, %17 : vector<8x256xf32>
    %c0_51 = arith.constant 0 : index
    %c0_52 = arith.constant 0 : index
    %c0_53 = arith.constant 0 : index
    %116 = vector.load %arg9[%c0_51, %c0_52, %c0_53] : memref<1x8x256xf32, #tpu.memory_space<vmem>>, vector<1x8x256xf32>
    %117 = vector.shape_cast %116 : vector<1x8x256xf32> to vector<8x256xf32>
    %118 = vector.shape_cast %115 : vector<8x256xf32> to vector<1x8x256xf32>
    tpu.vector_store %arg9[%c0_51, %c0_52, %c0_53], %118 {strides = array<i32>} : memref<1x8x256xf32, #tpu.memory_space<vmem>>, vector<1x8x256xf32>,
    return
  }
  func.func @transform_0(%arg0: i32) -> (i32, i32, i32) {
    %c0_i32 = arith.constant 0 : i32
    %c0_i32_0 = arith.constant 0 : i32
    %c0_i32_1 = arith.constant 0 : i32
    return %arg0, %c0_i32, %c0_i32_0 : i32, i32, i32
  }
  func.func @transform_1(%arg0: i32) -> (i32, i32, i32) {
    %c0_i32 = arith.constant 0 : i32
    %c0_i32_0 = arith.constant 0 : i32
    %c0_i32_1 = arith.constant 0 : i32
    %c0_i32_2 = arith.constant 0 : i32
    return %c0_i32, %c0_i32_0, %c0_i32_1 : i32, i32, i32
  }
  func.func @transform_2(%arg0: i32) -> (i32, i32) {
    %c0_i32 = arith.constant 0 : i32
    %c0_i32_0 = arith.constant 0 : i32
    %c0_i32_1 = arith.constant 0 : i32
    return %c0_i32, %c0_i32_0 : i32, i32
  }
  func.func @transform_3(%arg0: i32) -> (i32, i32) {
    %c0_i32 = arith.constant 0 : i32
    %c0_i32_0 = arith.constant 0 : i32
    %c0_i32_1 = arith.constant 0 : i32
    return %c0_i32, %c0_i32_0 : i32, i32
  }
  func.func @transform_4(%arg0: i32) -> (i32, i32) {
    %c0_i32 = arith.constant 0 : i32
    %c0_i32_0 = arith.constant 0 : i32
    %c0_i32_1 = arith.constant 0 : i32
    return %c0_i32, %c0_i32_0 : i32, i32
  }
  func.func @transform_5(%arg0: i32) -> (i32, i32) {
    %c0_i32 = arith.constant 0 : i32
    %c0_i32_0 = arith.constant 0 : i32
    %c0_i32_1 = arith.constant 0 : i32
    return %c0_i32, %c0_i32_0 : i32, i32
  }
  func.func @transform_6(%arg0: i32) -> (i32, i32) {
    %c0_i32 = arith.constant 0 : i32
    %c0_i32_0 = arith.constant 0 : i32
    %c0_i32_1 = arith.constant 0 : i32
    return %c0_i32, %c0_i32_0 : i32, i32
  }
  func.func @transform_7(%arg0: i32) -> (i32, i32) {
    %c0_i32 = arith.constant 0 : i32
    %c0_i32_0 = arith.constant 0 : i32
    %c0_i32_1 = arith.constant 0 : i32
    return %c0_i32, %c0_i32_0 : i32, i32
  }
  func.func @transform_8(%arg0: i32) -> (i32, i32, i32) {
    %c0_i32 = arith.constant 0 : i32
    %c0_i32_0 = arith.constant 0 : i32
    %c0_i32_1 = arith.constant 0 : i32
    return %arg0, %c0_i32, %c0_i32_0 : i32, i32, i32
  }
}

</mosaic_0001>

<llo_original>
// kernel: shnet_forward.1
$region0: #{shnet_forward.1}
  #allocation0 [shape = 'u32[]', space=smem, size = 0x4, offset = 0x4, fixed_abs, tag = 'smem constant byte address 0x4 - core index']
  #allocation1 [shape = 'u32[144,128]{1,0:T(1,128)}', space=vmem, size = 0x12000, scoped, tag = 'internal scratch']
  %s0 = inlined_call_operand.vmem [shape: f32[2,8,256], index: 0, kind: input, shape index: {}]
  %s1 = inlined_call_operand.vmem [shape: f32[9,1,256], index: 1, kind: input, shape index: {}]
  %s2 = inlined_call_operand.vmem [shape: bf16[32,72], index: 2, kind: input, shape index: {}]
  %s3 = inlined_call_operand.vmem [shape: f32[32,1], index: 3, kind: input, shape index: {}]
  %s4 = inlined_call_operand.vmem [shape: bf16[32,288], index: 4, kind: input, shape index: {}]
  %s5 = inlined_call_operand.vmem [shape: f32[32,1], index: 5, kind: input, shape index: {}]
  %s6 = inlined_call_operand.vmem [shape: bf16[8,288], index: 6, kind: input, shape index: {}]
  %s7 = inlined_call_operand.vmem [shape: f32[8,1], index: 7, kind: input, shape index: {}]
  %s8 = inlined_call_operand.vmem [shape: f32[2,8,256], index: 8, kind: output, shape index: {}]
  %s9 = sld [smem:[#allocation0]]
  $region65: #{shnet_forward.1} parent=0
    _
  %s11 = ssub.s32 1, %s9
  %s12 = scalar_select 0, %s11, %s9
  loop: start=0, step=1, limit=4
  $region2: #{shnet_forward.1} parent=0 // loop_pre_header
    _
  $region3: #{shnet_forward.1} parent=0 // loop_header
    %s14 = sphi 0, %s18
    %p15 = scmp.ge.s32.totalorder %s14, 4
    %s24 = sphi 0, %s26
    %s27 = sphi 0, %s24
    %s28 = sphi 0, %s27
    %s44 = sphi 0, %s28
    %s48 = sphi 0, %s48
    %s50 = sphi 0, %s48
    %s51 = sphi 0, %s50
    %s65 = sphi 0, %s51
    %s69 = sphi 0, %s69
    %s71 = sphi 0, %s69
    %s72 = sphi 0, %s71
    %s86 = sphi 0, %s72
    %s90 = sphi 0, %s90
    %s92 = sphi 0, %s90
    %s93 = sphi 0, %s92
    %s107 = sphi 0, %s93
    %s111 = sphi 0, %s111
    %s113 = sphi 0, %s111
    %s114 = sphi 0, %s113
    %s128 = sphi 0, %s114
    %s132 = sphi 0, %s132
    %s134 = sphi 0, %s132
    %s135 = sphi 0, %s134
    %s149 = sphi 0, %s135
    %s153 = sphi 0, %s153
    %s155 = sphi 0, %s153
    %s156 = sphi 0, %s155
    %s170 = sphi 0, %s156
    %s174 = sphi 0, %s174
    %s176 = sphi 0, %s174
    %s177 = sphi 0, %s176
    %s191 = sphi 0, %s177
    %s197 = sphi 0, %s199
    %s200 = sphi 0, %s197
    %s201 = sphi 0, %s200
    %s217 = sphi 0, %s201
  $region4: #{shnet_forward.1} parent=0 // loop_header_branch
    %17 = sbr.rel (%p15) target = $region8
  $region5: #{shnet_forward.1} parent=0 // loop_body
    %s19 = ssub.s32 %s14, 1
    %s20 = ssub.s32 %s14, 2
    %s21 = sadd.s32 %s14, 1
    %s22 = ssub.s32 %s14, %s21
    %p23 = scmp.eq.s32.totalorder %s22, 0
    %s25 = sadd.s32 %s24, 1
    %s26 = scalar_select %p23, %s24, %s25
    %p29 = pneg %p23
    %p30 = scmp.eq.s32.totalorder %s14, 1
    %p31 = por %p29, %p30
    %p32 = scmp.ne.s32.totalorder %s24, %s27
    %p33 = scmp.eq.s32.totalorder %s14, 0
    %p34 = por %p32, %p33
    %p35 = scmp.ne.s32.totalorder %s24, %s27
    %p36 = scmp.eq.s32.totalorder %s19, 1
    %p37 = por %p35, %p36
    %p38 = scmp.ne.s32.totalorder %s27, %s28
    %p39 = scmp.eq.s32.totalorder %s19, 0
    %p40 = por %p38, %p39
    %p41 = scmp.ne.s32.totalorder %s27, %s28
    %p42 = scmp.eq.s32.totalorder %s20, 1
    %p43 = por %p41, %p42
    %p45 = scmp.ne.s32.totalorder %s28, %s44
    %p46 = scmp.eq.s32.totalorder %s20, 0
    %p47 = por %p45, %p46
    %s49 = sadd.s32 %s48, 1
    %p52 = scmp.eq.s32.totalorder %s14, 1
    %p53 = scmp.ne.s32.totalorder %s48, %s50
    %p54 = scmp.eq.s32.totalorder %s14, 0
    %p55 = por %p53, %p54
    %p56 = scmp.ne.s32.totalorder %s48, %s50
    %p57 = scmp.eq.s32.totalorder %s19, 1
    %p58 = por %p56, %p57
    %p59 = scmp.ne.s32.totalorder %s50, %s51
    %p60 = scmp.eq.s32.totalorder %s19, 0
    %p61 = por %p59, %p60
    %p62 = scmp.ne.s32.totalorder %s50, %s51
    %p63 = scmp.eq.s32.totalorder %s20, 1
    %p64 = por %p62, %p63
    %p66 = scmp.ne.s32.totalorder %s51, %s65
    %p67 = scmp.eq.s32.totalorder %s20, 0
    %p68 = por %p66, %p67
    %s70 = sadd.s32 %s69, 1
    %p73 = scmp.eq.s32.totalorder %s14, 1
    %p74 = scmp.ne.s32.totalorder %s69, %s71
    %p75 = scmp.eq.s32.totalorder %s14, 0
    %p76 = por %p74, %p75
    %p77 = scmp.ne.s32.totalorder %s69, %s71
    %p78 = scmp.eq.s32.totalorder %s19, 1
    %p79 = por %p77, %p78
    %p80 = scmp.ne.s32.totalorder %s71, %s72
    %p81 = scmp.eq.s32.totalorder %s19, 0
    %p82 = por %p80, %p81
    %p83 = scmp.ne.s32.totalorder %s71, %s72
    %p84 = scmp.eq.s32.totalorder %s20, 1
    %p85 = por %p83, %p84
    %p87 = scmp.ne.s32.totalorder %s72, %s86
    %p88 = scmp.eq.s32.totalorder %s20, 0
    %p89 = por %p87, %p88
    %s91 = sadd.s32 %s90, 1
    %p94 = scmp.eq.s32.totalorder %s14, 1
    %p95 = scmp.ne.s32.totalorder %s90, %s92
    %p96 = scmp.eq.s32.totalorder %s14, 0
    %p97 = por %p95, %p96
    %p98 = scmp.ne.s32.totalorder %s90, %s92
    %p99 = scmp.eq.s32.totalorder %s19, 1
    %p100 = por %p98, %p99
    %p101 = scmp.ne.s32.totalorder %s92, %s93
    %p102 = scmp.eq.s32.totalorder %s19, 0
    %p103 = por %p101, %p102
    %p104 = scmp.ne.s32.totalorder %s92, %s93
    %p105 = scmp.eq.s32.totalorder %s20, 1
    %p106 = por %p104, %p105
    %p108 = scmp.ne.s32.totalorder %s93, %s107
    %p109 = scmp.eq.s32.totalorder %s20, 0
    %p110 = por %p108, %p109
    %s112 = sadd.s32 %s111, 1
    %p115 = scmp.eq.s32.totalorder %s14, 1
    %p116 = scmp.ne.s32.totalorder %s111, %s113
    %p117 = scmp.eq.s32.totalorder %s14, 0
    %p118 = por %p116, %p117
    %p119 = scmp.ne.s32.totalorder %s111, %s113
    %p120 = scmp.eq.s32.totalorder %s19, 1
    %p121 = por %p119, %p120
    %p122 = scmp.ne.s32.totalorder %s113, %s114
    %p123 = scmp.eq.s32.totalorder %s19, 0
    %p124 = por %p122, %p123
    %p125 = scmp.ne.s32.totalorder %s113, %s114
    %p126 = scmp.eq.s32.totalorder %s20, 1
    %p127 = por %p125, %p126
    %p129 = scmp.ne.s32.totalorder %s114, %s128
    %p130 = scmp.eq.s32.totalorder %s20, 0
    %p131 = por %p129, %p130
    %s133 = sadd.s32 %s132, 1
    %p136 = scmp.eq.s32.totalorder %s14, 1
    %p137 = scmp.ne.s32.totalorder %s132, %s134
    %p138 = scmp.eq.s32.totalorder %s14, 0
    %p139 = por %p137, %p138
    %p140 = scmp.ne.s32.totalorder %s132, %s134
    %p141 = scmp.eq.s32.totalorder %s19, 1
    %p142 = por %p140, %p141
    %p143 = scmp.ne.s32.totalorder %s134, %s135
    %p144 = scmp.eq.s32.totalorder %s19, 0
    %p145 = por %p143, %p144
    %p146 = scmp.ne.s32.totalorder %s134, %s135
    %p147 = scmp.eq.s32.totalorder %s20, 1
    %p148 = por %p146, %p147
    %p150 = scmp.ne.s32.totalorder %s135, %s149
    %p151 = scmp.eq.s32.totalorder %s20, 0
    %p152 = por %p150, %p151
    %s154 = sadd.s32 %s153, 1
    %p157 = scmp.eq.s32.totalorder %s14, 1
    %p158 = scmp.ne.s32.totalorder %s153, %s155
    %p159 = scmp.eq.s32.totalorder %s14, 0
    %p160 = por %p158, %p159
    %p161 = scmp.ne.s32.totalorder %s153, %s155
    %p162 = scmp.eq.s32.totalorder %s19, 1
    %p163 = por %p161, %p162
    %p164 = scmp.ne.s32.totalorder %s155, %s156
    %p165 = scmp.eq.s32.totalorder %s19, 0
    %p166 = por %p164, %p165
    %p167 = scmp.ne.s32.totalorder %s155, %s156
    %p168 = scmp.eq.s32.totalorder %s20, 1
    %p169 = por %p167, %p168
    %p171 = scmp.ne.s32.totalorder %s156, %s170
    %p172 = scmp.eq.s32.totalorder %s20, 0
    %p173 = por %p171, %p172
    %s175 = sadd.s32 %s174, 1
    %p178 = scmp.eq.s32.totalorder %s14, 1
    %p179 = scmp.ne.s32.totalorder %s174, %s176
    %p180 = scmp.eq.s32.totalorder %s14, 0
    %p181 = por %p179, %p180
    %p182 = scmp.ne.s32.totalorder %s174, %s176
    %p183 = scmp.eq.s32.totalorder %s19, 1
    %p184 = por %p182, %p183
    %p185 = scmp.ne.s32.totalorder %s176, %s177
    %p186 = scmp.eq.s32.totalorder %s19, 0
    %p187 = por %p185, %p186
    %p188 = scmp.ne.s32.totalorder %s176, %s177
    %p189 = scmp.eq.s32.totalorder %s20, 1
    %p190 = por %p188, %p189
    %p192 = scmp.ne.s32.totalorder %s177, %s191
    %p193 = scmp.eq.s32.totalorder %s20, 0
    %p194 = por %p192, %p193
    %s195 = ssub.s32 %s14, %s21
    %p196 = scmp.eq.s32.totalorder %s195, 0
    %s198 = sadd.s32 %s197, 1
    %s199 = scalar_select %p196, %s197, %s198
    %p202 = pneg %p196
    %p203 = scmp.eq.s32.totalorder %s14, 1
    %p204 = por %p202, %p203
    %p205 = scmp.ne.s32.totalorder %s197, %s200
    %p206 = scmp.eq.s32.totalorder %s14, 0
    %p207 = por %p205, %p206
    %p208 = scmp.ne.s32.totalorder %s197, %s200
    %p209 = scmp.eq.s32.totalorder %s19, 1
    %p210 = por %p208, %p209
    %p211 = scmp.ne.s32.totalorder %s200, %s201
    %p212 = scmp.eq.s32.totalorder %s19, 0
    %p213 = por %p211, %p212
    %p214 = scmp.ne.s32.totalorder %s200, %s201
    %p215 = scmp.eq.s32.totalorder %s20, 1
    %p216 = por %p214, %p215
    %p218 = scmp.ne.s32.totalorder %s201, %s217
    %p219 = scmp.eq.s32.totalorder %s20, 0
    %p220 = por %p218, %p219
    %p221 = scmp.le.s32.totalorder 1, %s14
    %p222 = scmp.lt.s32.totalorder %s14, 3
    %p223 = pnand %p221, %p222
    %p224 = pneg %p223
    // Predicated region
    $region9: #{shnet_forward.1} parent=5 // pred_check
      _
    $region10: #{shnet_forward.1} parent=5 // pred_check_branch
      %226 = sbr.rel (%p223) target = $region12
    $region11: #{shnet_forward.1} parent=5 // pred_region
      %s227 = ssub.s32 %s14, 1
      // Predicated region
      $region13: #{shnet_forward.1} parent=11 // pred_check
        %p228 = pneg %p61
      $region14: #{shnet_forward.1} parent=11 // pred_check_branch
        %230 = sbr.rel (%p228) target = $region16
      $region15: #{shnet_forward.1} parent=11 // pred_region
        _
      $region16: #{shnet_forward.1} parent=11 // pred_fallthru
        _
      // Predicated region
      $region17: #{shnet_forward.1} parent=11 // pred_check
        %p231 = pneg %p82
      $region18: #{shnet_forward.1} parent=11 // pred_check_branch
        %233 = sbr.rel (%p231) target = $region20
      $region19: #{shnet_forward.1} parent=11 // pred_region
        _
      $region20: #{shnet_forward.1} parent=11 // pred_fallthru
        _
      // Predicated region
      $region21: #{shnet_forward.1} parent=11 // pred_check
        %p234 = pneg %p103
      $region22: #{shnet_forward.1} parent=11 // pred_check_branch
        %236 = sbr.rel (%p234) target = $region24
      $region23: #{shnet_forward.1} parent=11 // pred_region
        _
      $region24: #{shnet_forward.1} parent=11 // pred_fallthru
        _
      // Predicated region
      $region25: #{shnet_forward.1} parent=11 // pred_check
        %p237 = pneg %p124
      $region26: #{shnet_forward.1} parent=11 // pred_check_branch
        %239 = sbr.rel (%p237) target = $region28
      $region27: #{shnet_forward.1} parent=11 // pred_region
        _
      $region28: #{shnet_forward.1} parent=11 // pred_fallthru
        _
      // Predicated region
      $region29: #{shnet_forward.1} parent=11 // pred_check
        %p240 = pneg %p145
      $region30: #{shnet_forward.1} parent=11 // pred_check_branch
        %242 = sbr.rel (%p240) target = $region32
      $region31: #{shnet_forward.1} parent=11 // pred_region
        _
      $region32: #{shnet_forward.1} parent=11 // pred_fallthru
        _
      // Predicated region
      $region33: #{shnet_forward.1} parent=11 // pred_check
        %p243 = pneg %p166
      $region34: #{shnet_forward.1} parent=11 // pred_check_branch
        %245 = sbr.rel (%p243) target = $region36
      $region35: #{shnet_forward.1} parent=11 // pred_region
        _
      $region36: #{shnet_forward.1} parent=11 // pred_fallthru
        _
      // Predicated region
      $region37: #{shnet_forward.1} parent=11 // pred_check
        %p246 = pneg %p187
      $region38: #{shnet_forward.1} parent=11 // pred_check_branch
        %248 = sbr.rel (%p246) target = $region40
      $region39: #{shnet_forward.1} parent=11 // pred_region
        _
      $region40: #{shnet_forward.1} parent=11 // pred_fallthru
        _
    $region12: #{shnet_forward.1} parent=5 // pred_fallthru
      _
    %p249 = scmp.lt.s32.totalorder %s14, 2
    // Predicated region
    $region41: #{shnet_forward.1} parent=5 // pred_check
      %p250 = pneg %p249
    $region42: #{shnet_forward.1} parent=5 // pred_check_branch
      %252 = sbr.rel (%p250) target = $region44
    $region43: #{shnet_forward.1} parent=5 // pred_region
      // Predicated region
      $region45: #{shnet_forward.1} parent=43 // pred_check
        %p253 = pneg %p34
      $region46: #{shnet_forward.1} parent=43 // pred_check_branch
        %255 = sbr.rel (%p253) target = $region48
      $region47: #{shnet_forward.1} parent=43 // pred_region
        %p256 = scmp.lt.s32.totalorder %s14, 1
        %s257 = scalar_select %p256, %s14, 1
        %s258 = smul.addr %s257, 2
        %s259 = smul.addr %s258, 8
        %s260 = scalar_lea.vmem %s0, %s259
      $region48: #{shnet_forward.1} parent=43 // pred_fallthru
        _
    $region44: #{shnet_forward.1} parent=5 // pred_fallthru
      _
    %p261 = scmp.le.s32.totalorder 1, %s14
    %p262 = scmp.lt.s32.totalorder %s14, 3
    %p263 = pnand %p261, %p262
    %p264 = pneg %p263
    // Predicated region
    $region49: #{shnet_forward.1} parent=5 // pred_check
      _
    $region50: #{shnet_forward.1} parent=5 // pred_check_branch
      %266 = sbr.rel (%p263) target = $region52
    $region51: #{shnet_forward.1} parent=5 // pred_region
      %s267 = ssub.s32 %s14, 1
      %p268 = scmp.lt.s32.totalorder %s19, 1
      %s269 = scalar_select %p268, %s19, 1
      %s270 = smul.addr %s269, 2
      %s271 = smul.addr %s270, 8
      %s272 = scalar_lea.vmem %s0, %s271
      %p273 = pneg %p40
      %p274 = pneg %p37
      %p275 = pneg %p61
      %p276 = pneg %p58
      %p277 = pneg %p82
      %p278 = pneg %p79
      %p279 = pneg %p103
      %p280 = pneg %p100
      %p281 = pneg %p124
      %p282 = pneg %p121
      %p283 = pneg %p145
      %p284 = pneg %p142
      %p285 = pneg %p166
      %p286 = pneg %p163
      %p287 = pneg %p187
      %p288 = pneg %p184
      %p289 = pneg %p213
      %p290 = pneg %p210
      %p291 = scmp.lt.s32.totalorder %s19, 1
      %s292 = scalar_select %p291, %s19, 1
      %s293 = smul.addr %s292, 2
      %s294 = smul.addr %s293, 8
      %s295 = scalar_lea.vmem %s8, %s294
      %p296 = scmp.lt.s32.totalorder %s19, 1
      %s297 = scalar_select %p296, %s19, 1
      %s298 = smul.addr %s297, 2
      %s299 = smul.addr %s298, 8
      %s300 = scalar_lea.vmem %s0, %s299
      %p301 = scmp.lt.s32.totalorder %s19, 1
      %s302 = scalar_select %p301, %s19, 1
      %s303 = smul.addr %s302, 2
      %s304 = smul.addr %s303, 8
      %s305 = scalar_lea.vmem %s8, %s304
      %v307 = vld [vmem:[%s1] sm:$0x3]
      %s308 = scalar_lea.vmem %s1, 2
      %v309 = vld [vmem:[%s308] sm:$0x3]
      %s310 = scalar_lea.vmem %s1, 4
      %v311 = vld [vmem:[%s310] sm:$0x3]
      %s312 = scalar_lea.vmem %s1, 6
      %v313 = vld [vmem:[%s312] sm:$0x3]
      %s314 = scalar_lea.vmem %s1, 10
      %v315 = vld [vmem:[%s314] sm:$0x3]
      %s316 = scalar_lea.vmem %s1, 12
      %v317 = vld [vmem:[%s316] sm:$0x3]
      %s318 = scalar_lea.vmem %s1, 14
      %v319 = vld [vmem:[%s318] sm:$0x3]
      %s320 = scalar_lea.vmem %s1, 16
      %v321 = vld [vmem:[%s320] sm:$0x3]
      %v322 = vld [vmem:[%s300] sm:$0xff]
      %v323 = vld [vmem:[%s300 + $0x8] sm:$0xff]
      %324 = vrot.lane.b32.xlu0 %v322, 17
      %v325 = vpop.permute.xlu0 %324
      %326 = vrot.lane.b32.xlu0 %v323, 17
      %v327 = vpop.permute.xlu0 %326
      %v328 = vlaneseq
      %v329 = vand.u32 %v328, 127
      %vm330 = vcmp.lt.s32.totalorder %v329, 17
      %v331 = vsel %vm330, %v325, %v327
      %v332 = vsel %vm330, %v327, %v325
      %v334 = vlaneseq
      %v335 = vshrl.u32 %v334, 7
      %v336 = vsub.s32 0, %v335
      %v337 = vrot.slane %v307, %v336
      %v338 = vlaneseq
      %v339 = vshrl.u32 %v338, 7
      %v340 = vsub.s32 1, %v339
      %v341 = vrot.slane %v307, %v340
      %v344 = vmul.f32 %v332, %v337
      %v345 = vmul.f32 %v331, %v341
      %346 = vrot.lane.b32.xlu0 %v322, 16
      %v347 = vpop.permute.xlu0 %346
      %348 = vrot.lane.b32.xlu0 %v323, 16
      %v349 = vpop.permute.xlu0 %348
      %vm350 = vcmp.lt.s32.totalorder %v329, 16
      %v351 = vsel %vm350, %v347, %v349
      %v352 = vsel %vm350, %v349, %v347
      %v354 = vlaneseq
      %v355 = vshrl.u32 %v354, 7
      %v356 = vsub.s32 0, %v355
      %v357 = vrot.slane %v309, %v356
      %v358 = vlaneseq
      %v359 = vshrl.u32 %v358, 7
      %v360 = vsub.s32 1, %v359
      %v361 = vrot.slane %v309, %v360
      %v364 = vmul.f32 %v352, %v357
      %v365 = vmul.f32 %v351, %v361
      %366 = vrot.lane.b32.xlu0 %v322, 15
      %v367 = vpop.permute.xlu0 %366
      %368 = vrot.lane.b32.xlu0 %v323, 15
      %v369 = vpop.permute.xlu0 %368
      %vm370 = vcmp.lt.s32.totalorder %v329, 15
      %v371 = vsel %vm370, %v367, %v369
      %v372 = vsel %vm370, %v369, %v367
      %v374 = vlaneseq
      %v375 = vshrl.u32 %v374, 7
      %v376 = vsub.s32 0, %v375
      %v377 = vrot.slane %v311, %v376
      %v378 = vlaneseq
      %v379 = vshrl.u32 %v378, 7
      %v380 = vsub.s32 1, %v379
      %v381 = vrot.slane %v311, %v380
      %v384 = vmul.f32 %v372, %v377
      %v385 = vmul.f32 %v371, %v381
      %386 = vrot.lane.b32.xlu0 %v322, 1
      %v387 = vpop.permute.xlu0 %386
      %388 = vrot.lane.b32.xlu0 %v323, 1
      %v389 = vpop.permute.xlu0 %388
      %vm390 = vcmp.lt.s32.totalorder %v329, 1
      %v391 = vsel %vm390, %v387, %v389
      %v392 = vsel %vm390, %v389, %v387
      %v394 = vlaneseq
      %v395 = vshrl.u32 %v394, 7
      %v396 = vsub.s32 0, %v395
      %v397 = vrot.slane %v313, %v396
      %v398 = vlaneseq
      %v399 = vshrl.u32 %v398, 7
      %v400 = vsub.s32 1, %v399
      %v401 = vrot.slane %v313, %v400
      %v404 = vmul.f32 %v392, %v397
      %v405 = vmul.f32 %v391, %v401
      %406 = vrot.lane.b32.xlu0 %v322, 127
      %v407 = vpop.permute.xlu0 %406
      %408 = vrot.lane.b32.xlu0 %v323, 127
      %v409 = vpop.permute.xlu0 %408
      %vm410 = vcmp.lt.s32.totalorder %v329, 127
      %v411 = vsel %vm410, %v407, %v409
      %v412 = vsel %vm410, %v409, %v407
      %v414 = vlaneseq
      %v415 = vshrl.u32 %v414, 7
      %v416 = vsub.s32 0, %v415
      %v417 = vrot.slane %v315, %v416
      %v418 = vlaneseq
      %v419 = vshrl.u32 %v418, 7
      %v420 = vsub.s32 1, %v419
      %v421 = vrot.slane %v315, %v420
      %v424 = vmul.f32 %v411, %v417
      %v425 = vmul.f32 %v412, %v421
      %426 = vrot.lane.b32.xlu0 %v322, 113
      %v427 = vpop.permute.xlu0 %426
      %428 = vrot.lane.b32.xlu0 %v323, 113
      %v429 = vpop.permute.xlu0 %428
      %vm430 = vcmp.lt.s32.totalorder %v329, 113
      %v431 = vsel %vm430, %v427, %v429
      %v432 = vsel %vm430, %v429, %v427
      %v434 = vlaneseq
      %v435 = vshrl.u32 %v434, 7
      %v436 = vsub.s32 0, %v435
      %v437 = vrot.slane %v317, %v436
      %v438 = vlaneseq
      %v439 = vshrl.u32 %v438, 7
      %v440 = vsub.s32 1, %v439
      %v441 = vrot.slane %v317, %v440
      %v444 = vmul.f32 %v431, %v437
      %v445 = vmul.f32 %v432, %v441
      %446 = vrot.lane.b32.xlu0 %v322, 112
      %v447 = vpop.permute.xlu0 %446
      %448 = vrot.lane.b32.xlu0 %v323, 112
      %v449 = vpop.permute.xlu0 %448
      %vm450 = vcmp.lt.s32.totalorder %v329, 112
      %v451 = vsel %vm450, %v447, %v449
      %v452 = vsel %vm450, %v449, %v447
      %v454 = vlaneseq
      %v455 = vshrl.u32 %v454, 7
      %v456 = vsub.s32 0, %v455
      %v457 = vrot.slane %v319, %v456
      %v458 = vlaneseq
      %v459 = vshrl.u32 %v458, 7
      %v460 = vsub.s32 1, %v459
      %v461 = vrot.slane %v319, %v460
      %v464 = vmul.f32 %v451, %v457
      %v465 = vmul.f32 %v452, %v461
      %466 = vrot.lane.b32.xlu0 %v322, 111
      %v467 = vpop.permute.xlu0 %466
      %468 = vrot.lane.b32.xlu0 %v323, 111
      %v469 = vpop.permute.xlu0 %468
      %vm470 = vcmp.lt.s32.totalorder %v329, 111
      %v471 = vsel %vm470, %v467, %v469
      %v472 = vsel %vm470, %v469, %v467
      %v474 = vlaneseq
      %v475 = vshrl.u32 %v474, 7
      %v476 = vsub.s32 0, %v475
      %v477 = vrot.slane %v321, %v476
      %v478 = vlaneseq
      %v479 = vshrl.u32 %v478, 7
      %v480 = vsub.s32 1, %v479
      %v481 = vrot.slane %v321, %v480
      %v484 = vmul.f32 %v471, %v477
      %v485 = vmul.f32 %v472, %v481
      %v486 = vpack.c.bf16 %v364, %v344
      %v487 = vpack.c.bf16 %v365, %v345
      %v488 = vpack.c.bf16 %v404, %v384
      %v489 = vpack.c.bf16 %v405, %v385
      %v490 = vpack.c.bf16 %v424, %v322
      %v491 = vpack.c.bf16 %v425, %v323
      %v492 = vpack.c.bf16 %v464, %v444
      %v493 = vpack.c.bf16 %v465, %v445
      %v494 = vpack.c.bf16 %v484, %v484
      %v495 = vpack.c.bf16 %v485, %v485
      %v496 = vld [vmem:[%s2] sm:$0xf]
      %v497 = vld [vmem:[%s2 + $0x4] sm:$0xf]
      %v498 = vld [vmem:[%s2 + $0x8] sm:$0xf]
      %v499 = vld [vmem:[%s2 + $0xc] sm:$0xf]
      %v500 = vld [vmem:[%s3] sm:$0xff]
      %v501 = vld [vmem:[%s3 + $0x8] sm:$0xff]
      %v502 = vld [vmem:[%s3 + $0x10] sm:$0xff]
      %v503 = vld [vmem:[%s3 + $0x18] sm:$0xff]
      %505 = vset.pattern.permute.xlu0 0
      %506 = vperm.xlu0 %505, %v500
      %v507 = vpop.permute.xlu0 %506
      %510 = vset.pattern.permute.xlu0 0
      %511 = vperm.xlu0 %510, %v501
      %v512 = vpop.permute.xlu0 %511
      %515 = vset.pattern.permute.xlu0 0
      %516 = vperm.xlu0 %515, %v502
      %v517 = vpop.permute.xlu0 %516
      %520 = vset.pattern.permute.xlu0 0
      %521 = vperm.xlu0 %520, %v503
      %v522 = vpop.permute.xlu0 %521
      %v528 = vunpack.c.l.b16 %v496
      %v529 = vunpack.c.l.b16 %v497
      %v530 = vunpack.c.l.b16 %v498
      %v531 = vunpack.c.l.b16 %v499
      %v532 = vpack.c.b16 %v529, %v528
      %v533 = vpack.c.b16 %v531, %v530
      %vm534 = vcmask 588800
      %v536 = vsel %vm534, %v532, 0
      %v539 = vsel %vm534, %v533, 0
      %vm541 = vcmask 1043456
      %v543 = vsel %vm541, %v494, 0
      %v546 = vsel %vm541, %v495, 0
      %548 = vmatprep.subr.bf16.mxu0 %v487
      %549 = vmatpush1.bf16.msra.mxu0 %v486
      %550 = vmatprep.subr.bf16.mxu0 %v489
      %551 = vmatpush1.bf16.msra.mxu0 %v488
      %552 = vmatprep.subr.bf16.mxu0 %v491
      %553 = vmatpush1.bf16.msra.mxu0 %v490
      %554 = vmatprep.subr.bf16.mxu0 %v493
      %555 = vmatpush1.bf16.msra.mxu0 %v492
      %556 = vmatprep.subr.bf16.mxu0 %v546
      %557 = vmatpush1.bf16.msra.mxu0 %v543
      %558 = vmatprep.subr.bf16.mxu0 0
      %559 = vmatpush1.bf16.msra.mxu0 0
      %560 = vmatprep.subr.bf16.mxu0 0
      %561 = vmatpush1.bf16.msra.mxu0 0
      %562 = vmatprep.subr.bf16.mxu0 0
      %563 = vmatpush1.bf16.msra.mxu0 0
      %564 = vmatprep.subr.bf16.mxu0 0
      %565 = vmatpush1.bf16.msra.mxu0 0
      %566 = vmatprep.subr.bf16.mxu0 0
      %567 = vmatpush1.bf16.msra.mxu0 0
      %568 = vmatprep.subr.bf16.mxu0 0
      %569 = vmatpush1.bf16.msra.mxu0 0
      %570 = vmatprep.subr.bf16.mxu0 0
      %571 = vmatpush1.bf16.msra.mxu0 0
      %572 = vmatprep.subr.bf16.mxu0 0
      %573 = vmatpush1.bf16.msra.mxu0 0
      %574 = vmatprep.subr.bf16.mxu0 0
      %575 = vmatpush1.bf16.msra.mxu0 0
      %576 = vmatprep.subr.bf16.mxu0 0
      %577 = vmatpush1.bf16.msra.mxu0 0
      %578 = vmatprep.subr.bf16.mxu0 0
      %579 = vmatpush1.bf16.msra.mxu0 0
      %580 = vmatprep.mubr.bf16.mxu0 0
      %581 = vmatmul.mubr.bf16.gmra.mrb[0].mxu0 %v536
      %v582 = vpop.f32.mrb[0].mxu0
      %v583 = vadd.f32 %v507, %v582
      %v584 = vpop.f32.mrb[0].mxu0
      %v585 = vadd.f32 %v507, %v584
      %v586 = vpop.f32.mrb[0].mxu0
      %v587 = vadd.f32 %v512, %v586
      %v588 = vpop.f32.mrb[0].mxu0
      %v589 = vadd.f32 %v512, %v588
      %590 = vmatprep.mubr.bf16.mxu0 0
      %591 = vmatmul.mubr.bf16.gmra.mrb[0].mxu0 %v539
      %v592 = vpop.f32.mrb[0].mxu0
      %v593 = vadd.f32 %v517, %v592
      %v594 = vpop.f32.mrb[0].mxu0
      %v595 = vadd.f32 %v517, %v594
      %v596 = vpop.f32.mrb[0].mxu0
      %v597 = vadd.f32 %v522, %v596
      %v598 = vpop.f32.mrb[0].mxu0
      %v599 = vadd.f32 %v522, %v598
      %600 = vdwg.mxu0
      %v601 = vmax.f32 %v583, 0.0
      %v602 = vmax.f32 %v585, 0.0
      %v603 = vmax.f32 %v587, 0.0
      %v604 = vmax.f32 %v589, 0.0
      %v605 = vmax.f32 %v593, 0.0
      %v606 = vmax.f32 %v595, 0.0
      %v607 = vmax.f32 %v597, 0.0
      %v608 = vmax.f32 %v599, 0.0
      %609 = vrot.lane.b32.xlu0 %v601, 17
      %v610 = vpop.permute.xlu0 %609
      %611 = vrot.lane.b32.xlu0 %v603, 17
      %v612 = vpop.permute.xlu0 %611
      %613 = vrot.lane.b32.xlu0 %v605, 17
      %v614 = vpop.permute.xlu0 %613
      %615 = vrot.lane.b32.xlu0 %v607, 17
      %v616 = vpop.permute.xlu0 %615
      %617 = vrot.lane.b32.xlu0 %v602, 17
      %v618 = vpop.permute.xlu0 %617
      %619 = vrot.lane.b32.xlu0 %v604, 17
      %v620 = vpop.permute.xlu0 %619
      %621 = vrot.lane.b32.xlu0 %v606, 17
      %v622 = vpop.permute.xlu0 %621
      %623 = vrot.lane.b32.xlu0 %v608, 17
      %v624 = vpop.permute.xlu0 %623
      %v625 = vsel %vm330, %v610, %v618
      %v626 = vsel %vm330, %v612, %v620
      %v627 = vsel %vm330, %v614, %v622
      %v628 = vsel %vm330, %v616, %v624
      %v629 = vsel %vm330, %v618, %v610
      %v630 = vsel %vm330, %v620, %v612
      %v631 = vsel %vm330, %v622, %v614
      %v632 = vsel %vm330, %v624, %v616
      %v633 = vmul.f32 %v629, %v337
      %v634 = vmul.f32 %v625, %v341
      %v635 = vmul.f32 %v630, %v337
      %v636 = vmul.f32 %v626, %v341
      %v637 = vmul.f32 %v631, %v337
      %v638 = vmul.f32 %v627, %v341
      %v639 = vmul.f32 %v632, %v337
      %v640 = vmul.f32 %v628, %v341
      %641 = vrot.lane.b32.xlu0 %v601, 16
      %v642 = vpop.permute.xlu0 %641
      %643 = vrot.lane.b32.xlu0 %v603, 16
      %v644 = vpop.permute.xlu0 %643
      %645 = vrot.lane.b32.xlu0 %v605, 16
      %v646 = vpop.permute.xlu0 %645
      %647 = vrot.lane.b32.xlu0 %v607, 16
      %v648 = vpop.permute.xlu0 %647
      %649 = vrot.lane.b32.xlu0 %v602, 16
      %v650 = vpop.permute.xlu0 %649
      %651 = vrot.lane.b32.xlu0 %v604, 16
      %v652 = vpop.permute.xlu0 %651
      %653 = vrot.lane.b32.xlu0 %v606, 16
      %v654 = vpop.permute.xlu0 %653
      %655 = vrot.lane.b32.xlu0 %v608, 16
      %v656 = vpop.permute.xlu0 %655
      %v657 = vsel %vm350, %v642, %v650
      %v658 = vsel %vm350, %v644, %v652
      %v659 = vsel %vm350, %v646, %v654
      %v660 = vsel %vm350, %v648, %v656
      %v661 = vsel %vm350, %v650, %v642
      %v662 = vsel %vm350, %v652, %v644
      %v663 = vsel %vm350, %v654, %v646
      %v664 = vsel %vm350, %v656, %v648
      %v665 = vmul.f32 %v661, %v357
      %v666 = vmul.f32 %v657, %v361
      %v667 = vmul.f32 %v662, %v357
      %v668 = vmul.f32 %v658, %v361
      %v669 = vmul.f32 %v663, %v357
      %v670 = vmul.f32 %v659, %v361
      %v671 = vmul.f32 %v664, %v357
      %v672 = vmul.f32 %v660, %v361
      %673 = vrot.lane.b32.xlu0 %v601, 15
      %v674 = vpop.permute.xlu0 %673
      %675 = vrot.lane.b32.xlu0 %v603, 15
      %v676 = vpop.permute.xlu0 %675
      %677 = vrot.lane.b32.xlu0 %v605, 15
      %v678 = vpop.permute.xlu0 %677
      %679 = vrot.lane.b32.xlu0 %v607, 15
      %v680 = vpop.permute.xlu0 %679
      %681 = vrot.lane.b32.xlu0 %v602, 15
      %v682 = vpop.permute.xlu0 %681
      %683 = vrot.lane.b32.xlu0 %v604, 15
      %v684 = vpop.permute.xlu0 %683
      %685 = vrot.lane.b32.xlu0 %v606, 15
      %v686 = vpop.permute.xlu0 %685
      %687 = vrot.lane.b32.xlu0 %v608, 15
      %v688 = vpop.permute.xlu0 %687
      %v689 = vsel %vm370, %v674, %v682
      %v690 = vsel %vm370, %v676, %v684
      %v691 = vsel %vm370, %v678, %v686
      %v692 = vsel %vm370, %v680, %v688
      %v693 = vsel %vm370, %v682, %v674
      %v694 = vsel %vm370, %v684, %v676
      %v695 = vsel %vm370, %v686, %v678
      %v696 = vsel %vm370, %v688, %v680
      %v697 = vmul.f32 %v693, %v377
      %v698 = vmul.f32 %v689, %v381
      %v699 = vmul.f32 %v694, %v377
      %v700 = vmul.f32 %v690, %v381
      %v701 = vmul.f32 %v695, %v377
      %v702 = vmul.f32 %v691, %v381
      %v703 = vmul.f32 %v696, %v377
      %v704 = vmul.f32 %v692, %v381
      %705 = vrot.lane.b32.xlu0 %v601, 1
      %v706 = vpop.permute.xlu0 %705
      %707 = vrot.lane.b32.xlu0 %v603, 1
      %v708 = vpop.permute.xlu0 %707
      %709 = vrot.lane.b32.xlu0 %v605, 1
      %v710 = vpop.permute.xlu0 %709
      %711 = vrot.lane.b32.xlu0 %v607, 1
      %v712 = vpop.permute.xlu0 %711
      %713 = vrot.lane.b32.xlu0 %v602, 1
      %v714 = vpop.permute.xlu0 %713
      %715 = vrot.lane.b32.xlu0 %v604, 1
      %v716 = vpop.permute.xlu0 %715
      %717 = vrot.lane.b32.xlu0 %v606, 1
      %v718 = vpop.permute.xlu0 %717
      %719 = vrot.lane.b32.xlu0 %v608, 1
      %v720 = vpop.permute.xlu0 %719
      %v721 = vsel %vm390, %v706, %v714
      %v722 = vsel %vm390, %v708, %v716
      %v723 = vsel %vm390, %v710, %v718
      %v724 = vsel %vm390, %v712, %v720
      %v725 = vsel %vm390, %v714, %v706
      %v726 = vsel %vm390, %v716, %v708
      %v727 = vsel %vm390, %v718, %v710
      %v728 = vsel %vm390, %v720, %v712
      %v729 = vmul.f32 %v725, %v397
      %v730 = vmul.f32 %v721, %v401
      %v731 = vmul.f32 %v726, %v397
      %v732 = vmul.f32 %v722, %v401
      %v733 = vmul.f32 %v727, %v397
      %v734 = vmul.f32 %v723, %v401
      %v735 = vmul.f32 %v728, %v397
      %v736 = vmul.f32 %v724, %v401
      %737 = vrot.lane.b32.xlu0 %v601, 127
      %v738 = vpop.permute.xlu0 %737
      %739 = vrot.lane.b32.xlu0 %v603, 127
      %v740 = vpop.permute.xlu0 %739
      %741 = vrot.lane.b32.xlu0 %v605, 127
      %v742 = vpop.permute.xlu0 %741
      %743 = vrot.lane.b32.xlu0 %v607, 127
      %v744 = vpop.permute.xlu0 %743
      %745 = vrot.lane.b32.xlu0 %v602, 127
      %v746 = vpop.permute.xlu0 %745
      %747 = vrot.lane.b32.xlu0 %v604, 127
      %v748 = vpop.permute.xlu0 %747
      %749 = vrot.lane.b32.xlu0 %v606, 127
      %v750 = vpop.permute.xlu0 %749
      %751 = vrot.lane.b32.xlu0 %v608, 127
      %v752 = vpop.permute.xlu0 %751
      %v753 = vsel %vm410, %v738, %v746
      %v754 = vsel %vm410, %v740, %v748
      %v755 = vsel %vm410, %v742, %v750
      %v756 = vsel %vm410, %v744, %v752
      %v757 = vsel %vm410, %v746, %v738
      %v758 = vsel %vm410, %v748, %v740
      %v759 = vsel %vm410, %v750, %v742
      %v760 = vsel %vm410, %v752, %v744
      %v761 = vmul.f32 %v753, %v417
      %v762 = vmul.f32 %v757, %v421
      %v763 = vmul.f32 %v754, %v417
      %v764 = vmul.f32 %v758, %v421
      %v765 = vmul.f32 %v755, %v417
      %v766 = vmul.f32 %v759, %v421
      %v767 = vmul.f32 %v756, %v417
      %v768 = vmul.f32 %v760, %v421
      %769 = vrot.lane.b32.xlu0 %v601, 113
      %v770 = vpop.permute.xlu0 %769
      %771 = vrot.lane.b32.xlu0 %v603, 113
      %v772 = vpop.permute.xlu0 %771
      %773 = vrot.lane.b32.xlu0 %v605, 113
      %v774 = vpop.permute.xlu0 %773
      %775 = vrot.lane.b32.xlu0 %v607, 113
      %v776 = vpop.permute.xlu0 %775
      %777 = vrot.lane.b32.xlu0 %v602, 113
      %v778 = vpop.permute.xlu0 %777
      %779 = vrot.lane.b32.xlu0 %v604, 113
      %v780 = vpop.permute.xlu0 %779
      %781 = vrot.lane.b32.xlu0 %v606, 113
      %v782 = vpop.permute.xlu0 %781
      %783 = vrot.lane.b32.xlu0 %v608, 113
      %v784 = vpop.permute.xlu0 %783
      %v785 = vsel %vm430, %v770, %v778
      %v786 = vsel %vm430, %v772, %v780
      %v787 = vsel %vm430, %v774, %v782
      %v788 = vsel %vm430, %v776, %v784
      %v789 = vsel %vm430, %v778, %v770
      %v790 = vsel %vm430, %v780, %v772
      %v791 = vsel %vm430, %v782, %v774
      %v792 = vsel %vm430, %v784, %v776
      %v793 = vmul.f32 %v785, %v437
      %v794 = vmul.f32 %v789, %v441
      %v795 = vmul.f32 %v786, %v437
      %v796 = vmul.f32 %v790, %v441
      %v797 = vmul.f32 %v787, %v437
      %v798 = vmul.f32 %v791, %v441
      %v799 = vmul.f32 %v788, %v437
      %v800 = vmul.f32 %v792, %v441
      %801 = vrot.lane.b32.xlu0 %v601, 112
      %v802 = vpop.permute.xlu0 %801
      %803 = vrot.lane.b32.xlu0 %v603, 112
      %v804 = vpop.permute.xlu0 %803
      %805 = vrot.lane.b32.xlu0 %v605, 112
      %v806 = vpop.permute.xlu0 %805
      %807 = vrot.lane.b32.xlu0 %v607, 112
      %v808 = vpop.permute.xlu0 %807
      %809 = vrot.lane.b32.xlu0 %v602, 112
      %v810 = vpop.permute.xlu0 %809
      %811 = vrot.lane.b32.xlu0 %v604, 112
      %v812 = vpop.permute.xlu0 %811
      %813 = vrot.lane.b32.xlu0 %v606, 112
      %v814 = vpop.permute.xlu0 %813
      %815 = vrot.lane.b32.xlu0 %v608, 112
      %v816 = vpop.permute.xlu0 %815
      %v817 = vsel %vm450, %v802, %v810
      %v818 = vsel %vm450, %v804, %v812
      %v819 = vsel %vm450, %v806, %v814
      %v820 = vsel %vm450, %v808, %v816
      %v821 = vsel %vm450, %v810, %v802
      %v822 = vsel %vm450, %v812, %v804
      %v823 = vsel %vm450, %v814, %v806
      %v824 = vsel %vm450, %v816, %v808
      %v825 = vmul.f32 %v817, %v457
      %v826 = vmul.f32 %v821, %v461
      %v827 = vmul.f32 %v818, %v457
      %v828 = vmul.f32 %v822, %v461
      %v829 = vmul.f32 %v819, %v457
      %v830 = vmul.f32 %v823, %v461
      %v831 = vmul.f32 %v820, %v457
      %v832 = vmul.f32 %v824, %v461
      %833 = vrot.lane.b32.xlu0 %v601, 111
      %v834 = vpop.permute.xlu0 %833
      %835 = vrot.lane.b32.xlu0 %v603, 111
      %v836 = vpop.permute.xlu0 %835
      %837 = vrot.lane.b32.xlu0 %v605, 111
      %v838 = vpop.permute.xlu0 %837
      %839 = vrot.lane.b32.xlu0 %v607, 111
      %v840 = vpop.permute.xlu0 %839
      %841 = vrot.lane.b32.xlu0 %v602, 111
      %v842 = vpop.permute.xlu0 %841
      %843 = vrot.lane.b32.xlu0 %v604, 111
      %v844 = vpop.permute.xlu0 %843
      %845 = vrot.lane.b32.xlu0 %v606, 111
      %v846 = vpop.permute.xlu0 %845
      %847 = vrot.lane.b32.xlu0 %v608, 111
      %v848 = vpop.permute.xlu0 %847
      %v849 = vsel %vm470, %v834, %v842
      %v850 = vsel %vm470, %v836, %v844
      %v851 = vsel %vm470, %v838, %v846
      %v852 = vsel %vm470, %v840, %v848
      %v853 = vsel %vm470, %v842, %v834
      %v854 = vsel %vm470, %v844, %v836
      %v855 = vsel %vm470, %v846, %v838
      %v856 = vsel %vm470, %v848, %v840
      %v857 = vmul.f32 %v849, %v477
      %v858 = vmul.f32 %v853, %v481
      %v859 = vmul.f32 %v850, %v477
      %v860 = vmul.f32 %v854, %v481
      %v861 = vmul.f32 %v851, %v477
      %v862 = vmul.f32 %v855, %v481
      %v863 = vmul.f32 %v852, %v477
      %v864 = vmul.f32 %v856, %v481
      %v865 = vpack.c.bf16 %v635, %v633
      %v866 = vpack.c.bf16 %v636, %v634
      %v867 = vpack.c.bf16 %v639, %v637
      %v868 = vpack.c.bf16 %v640, %v638
      %v869 = vpack.c.bf16 %v667, %v665
      %v870 = vpack.c.bf16 %v668, %v666
      %v871 = vpack.c.bf16 %v671, %v669
      %v872 = vpack.c.bf16 %v672, %v670
      %v873 = vpack.c.bf16 %v699, %v697
      %v874 = vpack.c.bf16 %v700, %v698
      %v875 = vpack.c.bf16 %v703, %v701
      %v876 = vpack.c.bf16 %v704, %v702
      %v877 = vpack.c.bf16 %v731, %v729
      %v878 = vpack.c.bf16 %v732, %v730
      %v879 = vpack.c.bf16 %v735, %v733
      %v880 = vpack.c.bf16 %v736, %v734
      %v881 = vpack.c.bf16 %v603, %v601
      %v882 = vpack.c.bf16 %v604, %v602
      %v883 = vpack.c.bf16 %v607, %v605
      %v884 = vpack.c.bf16 %v608, %v606
      %v885 = vpack.c.bf16 %v763, %v761
      %v886 = vpack.c.bf16 %v764, %v762
      %v887 = vpack.c.bf16 %v767, %v765
      %v888 = vpack.c.bf16 %v768, %v766
      %v889 = vpack.c.bf16 %v795, %v793
      %v890 = vpack.c.bf16 %v796, %v794
      %v891 = vpack.c.bf16 %v799, %v797
      %v892 = vpack.c.bf16 %v800, %v798
      %v893 = vpack.c.bf16 %v827, %v825
      %v894 = vpack.c.bf16 %v828, %v826
      %v895 = vpack.c.bf16 %v831, %v829
      %v896 = vpack.c.bf16 %v832, %v830
      %v897 = vpack.c.bf16 %v859, %v857
      %v898 = vpack.c.bf16 %v860, %v858
      %v899 = vpack.c.bf16 %v863, %v861
      %v900 = vpack.c.bf16 %v864, %v862
      %v901 = vld [vmem:[%s4] sm:$0xff]
      %v902 = vld [vmem:[%s4 + $0x8] sm:$0xf]
      %v903 = vld [vmem:[%s4 + $0xc] sm:$0xff]
      %v904 = vld [vmem:[%s4 + $0x14] sm:$0xf]
      %v905 = vld [vmem:[%s4 + $0x18] sm:$0xff]
      %v906 = vld [vmem:[%s4 + $0x20] sm:$0xf]
      %v907 = vld [vmem:[%s4 + $0x24] sm:$0xff]
      %v908 = vld [vmem:[%s4 + $0x2c] sm:$0xf]
      %v909 = vld [vmem:[%s5] sm:$0xff]
      %v910 = vld [vmem:[%s5 + $0x8] sm:$0xff]
      %v911 = vld [vmem:[%s5 + $0x10] sm:$0xff]
      %v912 = vld [vmem:[%s5 + $0x18] sm:$0xff]
      %914 = vset.pattern.permute.xlu0 0
      %915 = vperm.xlu0 %914, %v909
      %v916 = vpop.permute.xlu0 %915
      %919 = vset.pattern.permute.xlu0 0
      %920 = vperm.xlu0 %919, %v910
      %v921 = vpop.permute.xlu0 %920
      %924 = vset.pattern.permute.xlu0 0
      %925 = vperm.xlu0 %924, %v911
      %v926 = vpop.permute.xlu0 %925
      %929 = vset.pattern.permute.xlu0 0
      %930 = vperm.xlu0 %929, %v912
      %v931 = vpop.permute.xlu0 %930
      %v941 = vunpack.c.l.b16 %v901
      %v942 = vunpack.c.h.b16 %v901
      %v943 = vunpack.c.l.b16 %v902
      %v944 = vunpack.c.l.b16 %v903
      %v945 = vunpack.c.h.b16 %v903
      %v946 = vunpack.c.l.b16 %v904
      %v947 = vunpack.c.l.b16 %v905
      %v948 = vunpack.c.h.b16 %v905
      %v949 = vunpack.c.l.b16 %v906
      %v950 = vunpack.c.l.b16 %v907
      %v951 = vunpack.c.h.b16 %v907
      %v952 = vunpack.c.l.b16 %v908
      %v953 = vpack.c.b16 %v944, %v941
      %v954 = vpack.c.b16 %v945, %v942
      %v955 = vpack.c.b16 %v946, %v943
      %v956 = vpack.c.b16 %v950, %v947
      %v957 = vpack.c.b16 %v951, %v948
      %v958 = vpack.c.b16 %v952, %v949
      %vm963 = vcmask 261120
      %v965 = vsel %vm963, %v955, 0
      %v968 = vsel %vm963, %v958, 0
      %970 = vmatprep.subr.bf16.mxu0 %v866
      %971 = vmatpush1.bf16.msra.mxu0 %v865
      %972 = vmatprep.subr.bf16.mxu0 %v868
      %973 = vmatpush1.bf16.msra.mxu0 %v867
      %974 = vmatprep.subr.bf16.mxu0 %v870
      %975 = vmatpush1.bf16.msra.mxu0 %v869
      %976 = vmatprep.subr.bf16.mxu0 %v872
      %977 = vmatpush1.bf16.msra.mxu0 %v871
      %978 = vmatprep.subr.bf16.mxu0 %v874
      %979 = vmatpush1.bf16.msra.mxu0 %v873
      %980 = vmatprep.subr.bf16.mxu0 %v876
      %981 = vmatpush1.bf16.msra.mxu0 %v875
      %982 = vmatprep.subr.bf16.mxu0 %v878
      %983 = vmatpush1.bf16.msra.mxu0 %v877
      %984 = vmatprep.subr.bf16.mxu0 %v880
      %985 = vmatpush1.bf16.msra.mxu0 %v879
      %986 = vmatprep.subr.bf16.mxu0 %v882
      %987 = vmatpush1.bf16.msra.mxu0 %v881
      %988 = vmatprep.subr.bf16.mxu0 %v884
      %989 = vmatpush1.bf16.msra.mxu0 %v883
      %990 = vmatprep.subr.bf16.mxu0 %v886
      %991 = vmatpush1.bf16.msra.mxu0 %v885
      %992 = vmatprep.subr.bf16.mxu0 %v888
      %993 = vmatpush1.bf16.msra.mxu0 %v887
      %994 = vmatprep.subr.bf16.mxu0 %v890
      %995 = vmatpush1.bf16.msra.mxu0 %v889
      %996 = vmatprep.subr.bf16.mxu0 %v892
      %997 = vmatpush1.bf16.msra.mxu0 %v891
      %998 = vmatprep.subr.bf16.mxu0 %v894
      %999 = vmatpush1.bf16.msra.mxu0 %v893
      %1000 = vmatprep.subr.bf16.mxu0 %v896
      %1001 = vmatpush1.bf16.msra.mxu0 %v895
      %1002 = vmatprep.mubr.bf16.mxu0 %v954
      %1003 = vmatmul.mubr.bf16.gmra.mrb[0].mxu0 %v953
      %v1004 = vpop.f32.mrb[0].mxu0
      %v1005 = vadd.f32 %v916, %v1004
      %v1006 = vpop.f32.mrb[0].mxu0
      %v1007 = vadd.f32 %v916, %v1006
      %v1008 = vpop.f32.mrb[0].mxu0
      %v1009 = vadd.f32 %v921, %v1008
      %v1010 = vpop.f32.mrb[0].mxu0
      %v1011 = vadd.f32 %v921, %v1010
      %1012 = vmatprep.mubr.bf16.mxu0 %v957
      %1013 = vmatmul.mubr.bf16.gmra.mrb[0].mxu0 %v956
      %v1014 = vpop.f32.mrb[0].mxu0
      %v1015 = vadd.f32 %v926, %v1014
      %v1016 = vpop.f32.mrb[0].mxu0
      %v1017 = vadd.f32 %v926, %v1016
      %v1018 = vpop.f32.mrb[0].mxu0
      %v1019 = vadd.f32 %v931, %v1018
      %v1020 = vpop.f32.mrb[0].mxu0
      %v1021 = vadd.f32 %v931, %v1020
      %1022 = vdwg.mxu0
      %1023 = vmatprep.subr.bf16.mxu0 %v898
      %1024 = vmatpush1.bf16.msra.mxu0 %v897
      %1025 = vmatprep.subr.bf16.mxu0 %v900
      %1026 = vmatpush1.bf16.msra.mxu0 %v899
      %1027 = vmatprep.subr.bf16.mxu0 0
      %1028 = vmatpush1.bf16.msra.mxu0 0
      %1029 = vmatprep.subr.bf16.mxu0 0
      %1030 = vmatpush1.bf16.msra.mxu0 0
      %1031 = vmatprep.subr.bf16.mxu0 0
      %1032 = vmatpush1.bf16.msra.mxu0 0
      %1033 = vmatprep.subr.bf16.mxu0 0
      %1034 = vmatpush1.bf16.msra.mxu0 0
      %1035 = vmatprep.subr.bf16.mxu0 0
      %1036 = vmatpush1.bf16.msra.mxu0 0
      %1037 = vmatprep.subr.bf16.mxu0 0
      %1038 = vmatpush1.bf16.msra.mxu0 0
      %1039 = vmatprep.subr.bf16.mxu0 0
      %1040 = vmatpush1.bf16.msra.mxu0 0
      %1041 = vmatprep.subr.bf16.mxu0 0
      %1042 = vmatpush1.bf16.msra.mxu0 0
      %1043 = vmatprep.subr.bf16.mxu0 0
      %1044 = vmatpush1.bf16.msra.mxu0 0
      %1045 = vmatprep.subr.bf16.mxu0 0
      %1046 = vmatpush1.bf16.msra.mxu0 0
      %1047 = vmatprep.subr.bf16.mxu0 0
      %1048 = vmatpush1.bf16.msra.mxu0 0
      %1049 = vmatprep.subr.bf16.mxu0 0
      %1050 = vmatpush1.bf16.msra.mxu0 0
      %1051 = vmatprep.subr.bf16.mxu0 0
      %1052 = vmatpush1.bf16.msra.mxu0 0
      %1053 = vmatprep.subr.bf16.mxu0 0
      %1054 = vmatpush1.bf16.msra.mxu0 0
      %1055 = vmatprep.mubr.bf16.mxu0 0
      %1056 = vmatmul.mubr.bf16.gmra.mrb[0].mxu0 %v965
      %v1057 = vpop.f32.mrb[0].mxu0
      %v1058 = vadd.f32 %v1005, %v1057
      %v1059 = vpop.f32.mrb[0].mxu0
      %v1060 = vadd.f32 %v1007, %v1059
      %v1061 = vpop.f32.mrb[0].mxu0
      %v1062 = vadd.f32 %v1009, %v1061
      %v1063 = vpop.f32.mrb[0].mxu0
      %v1064 = vadd.f32 %v1011, %v1063
      %1065 = vmatprep.mubr.bf16.mxu0 0
      %1066 = vmatmul.mubr.bf16.gmra.mrb[0].mxu0 %v968
      %v1067 = vpop.f32.mrb[0].mxu0
      %v1068 = vadd.f32 %v1015, %v1067
      %v1069 = vpop.f32.mrb[0].mxu0
      %v1070 = vadd.f32 %v1017, %v1069
      %v1071 = vpop.f32.mrb[0].mxu0
      %v1072 = vadd.f32 %v1019, %v1071
      %v1073 = vpop.f32.mrb[0].mxu0
      %v1074 = vadd.f32 %v1021, %v1073
      %1075 = vdwg.mxu0
      %v1076 = vmax.f32 %v1058, 0.0
      %v1077 = vmax.f32 %v1060, 0.0
      %v1078 = vmax.f32 %v1062, 0.0
      %v1079 = vmax.f32 %v1064, 0.0
      %v1080 = vmax.f32 %v1068, 0.0
      %v1081 = vmax.f32 %v1070, 0.0
      %v1082 = vmax.f32 %v1072, 0.0
      %v1083 = vmax.f32 %v1074, 0.0
      %1084 = vrot.lane.b32.xlu0 %v1076, 17
      %v1085 = vpop.permute.xlu0 %1084
      %1086 = vrot.lane.b32.xlu0 %v1078, 17
      %v1087 = vpop.permute.xlu0 %1086
      %1088 = vrot.lane.b32.xlu0 %v1080, 17
      %v1089 = vpop.permute.xlu0 %1088
      %1090 = vrot.lane.b32.xlu0 %v1082, 17
      %v1091 = vpop.permute.xlu0 %1090
      %1092 = vrot.lane.b32.xlu0 %v1077, 17
      %v1093 = vpop.permute.xlu0 %1092
      %1094 = vrot.lane.b32.xlu0 %v1079, 17
      %v1095 = vpop.permute.xlu0 %1094
      %1096 = vrot.lane.b32.xlu0 %v1081, 17
      %v1097 = vpop.permute.xlu0 %1096
      %1098 = vrot.lane.b32.xlu0 %v1083, 17
      %v1099 = vpop.permute.xlu0 %1098
      %v1100 = vsel %vm330, %v1085, %v1093
      %v1101 = vsel %vm330, %v1087, %v1095
      %v1102 = vsel %vm330, %v1089, %v1097
      %v1103 = vsel %vm330, %v1091, %v1099
      %v1104 = vsel %vm330, %v1093, %v1085
      %v1105 = vsel %vm330, %v1095, %v1087
      %v1106 = vsel %vm330, %v1097, %v1089
      %v1107 = vsel %vm330, %v1099, %v1091
      %v1108 = vmul.f32 %v1104, %v337
      %v1109 = vmul.f32 %v1100, %v341
      %v1110 = vmul.f32 %v1105, %v337
      %v1111 = vmul.f32 %v1101, %v341
      %v1112 = vmul.f32 %v1106, %v337
      %v1113 = vmul.f32 %v1102, %v341
      %v1114 = vmul.f32 %v1107, %v337
      %v1115 = vmul.f32 %v1103, %v341
      %1116 = vrot.lane.b32.xlu0 %v1076, 16
      %v1117 = vpop.permute.xlu0 %1116
      %1118 = vrot.lane.b32.xlu0 %v1078, 16
      %v1119 = vpop.permute.xlu0 %1118
      %1120 = vrot.lane.b32.xlu0 %v1080, 16
      %v1121 = vpop.permute.xlu0 %1120
      %1122 = vrot.lane.b32.xlu0 %v1082, 16
      %v1123 = vpop.permute.xlu0 %1122
      %1124 = vrot.lane.b32.xlu0 %v1077, 16
      %v1125 = vpop.permute.xlu0 %1124
      %1126 = vrot.lane.b32.xlu0 %v1079, 16
      %v1127 = vpop.permute.xlu0 %1126
      %1128 = vrot.lane.b32.xlu0 %v1081, 16
      %v1129 = vpop.permute.xlu0 %1128
      %1130 = vrot.lane.b32.xlu0 %v1083, 16
      %v1131 = vpop.permute.xlu0 %1130
      %v1132 = vsel %vm350, %v1117, %v1125
      %v1133 = vsel %vm350, %v1119, %v1127
      %v1134 = vsel %vm350, %v1121, %v1129
      %v1135 = vsel %vm350, %v1123, %v1131
      %v1136 = vsel %vm350, %v1125, %v1117
      %v1137 = vsel %vm350, %v1127, %v1119
      %v1138 = vsel %vm350, %v1129, %v1121
      %v1139 = vsel %vm350, %v1131, %v1123
      %v1140 = vmul.f32 %v1136, %v357
      %v1141 = vmul.f32 %v1132, %v361
      %v1142 = vmul.f32 %v1137, %v357
      %v1143 = vmul.f32 %v1133, %v361
      %v1144 = vmul.f32 %v1138, %v357
      %v1145 = vmul.f32 %v1134, %v361
      %v1146 = vmul.f32 %v1139, %v357
      %v1147 = vmul.f32 %v1135, %v361
      %1148 = vrot.lane.b32.xlu0 %v1076, 15
      %v1149 = vpop.permute.xlu0 %1148
      %1150 = vrot.lane.b32.xlu0 %v1078, 15
      %v1151 = vpop.permute.xlu0 %1150
      %1152 = vrot.lane.b32.xlu0 %v1080, 15
      %v1153 = vpop.permute.xlu0 %1152
      %1154 = vrot.lane.b32.xlu0 %v1082, 15
      %v1155 = vpop.permute.xlu0 %1154
      %1156 = vrot.lane.b32.xlu0 %v1077, 15
      %v1157 = vpop.permute.xlu0 %1156
      %1158 = vrot.lane.b32.xlu0 %v1079, 15
      %v1159 = vpop.permute.xlu0 %1158
      %1160 = vrot.lane.b32.xlu0 %v1081, 15
      %v1161 = vpop.permute.xlu0 %1160
      %1162 = vrot.lane.b32.xlu0 %v1083, 15
      %v1163 = vpop.permute.xlu0 %1162
      %v1164 = vsel %vm370, %v1149, %v1157
      %v1165 = vsel %vm370, %v1151, %v1159
      %v1166 = vsel %vm370, %v1153, %v1161
      %v1167 = vsel %vm370, %v1155, %v1163
      %v1168 = vsel %vm370, %v1157, %v1149
      %v1169 = vsel %vm370, %v1159, %v1151
      %v1170 = vsel %vm370, %v1161, %v1153
      %v1171 = vsel %vm370, %v1163, %v1155
      %v1172 = vmul.f32 %v1168, %v377
      %v1173 = vmul.f32 %v1164, %v381
      %v1174 = vmul.f32 %v1169, %v377
      %v1175 = vmul.f32 %v1165, %v381
      %v1176 = vmul.f32 %v1170, %v377
      %v1177 = vmul.f32 %v1166, %v381
      %v1178 = vmul.f32 %v1171, %v377
      %v1179 = vmul.f32 %v1167, %v381
      %1180 = vrot.lane.b32.xlu0 %v1076, 1
      %v1181 = vpop.permute.xlu0 %1180
      %1182 = vrot.lane.b32.xlu0 %v1078, 1
      %v1183 = vpop.permute.xlu0 %1182
      %1184 = vrot.lane.b32.xlu0 %v1080, 1
      %v1185 = vpop.permute.xlu0 %1184
      %1186 = vrot.lane.b32.xlu0 %v1082, 1
      %v1187 = vpop.permute.xlu0 %1186
      %1188 = vrot.lane.b32.xlu0 %v1077, 1
      %v1189 = vpop.permute.xlu0 %1188
      %1190 = vrot.lane.b32.xlu0 %v1079, 1
      %v1191 = vpop.permute.xlu0 %1190
      %1192 = vrot.lane.b32.xlu0 %v1081, 1
      %v1193 = vpop.permute.xlu0 %1192
      %1194 = vrot.lane.b32.xlu0 %v1083, 1
      %v1195 = vpop.permute.xlu0 %1194
      %v1196 = vsel %vm390, %v1181, %v1189
      %v1197 = vsel %vm390, %v1183, %v1191
      %v1198 = vsel %vm390, %v1185, %v1193
      %v1199 = vsel %vm390, %v1187, %v1195
      %v1200 = vsel %vm390, %v1189, %v1181
      %v1201 = vsel %vm390, %v1191, %v1183
      %v1202 = vsel %vm390, %v1193, %v1185
      %v1203 = vsel %vm390, %v1195, %v1187
      %v1204 = vmul.f32 %v1200, %v397
      %v1205 = vmul.f32 %v1196, %v401
      %v1206 = vmul.f32 %v1201, %v397
      %v1207 = vmul.f32 %v1197, %v401
      %v1208 = vmul.f32 %v1202, %v397
      %v1209 = vmul.f32 %v1198, %v401
      %v1210 = vmul.f32 %v1203, %v397
      %v1211 = vmul.f32 %v1199, %v401
      %1212 = vrot.lane.b32.xlu0 %v1076, 127
      %v1213 = vpop.permute.xlu0 %1212
      %1214 = vrot.lane.b32.xlu0 %v1078, 127
      %v1215 = vpop.permute.xlu0 %1214
      %1216 = vrot.lane.b32.xlu0 %v1080, 127
      %v1217 = vpop.permute.xlu0 %1216
      %1218 = vrot.lane.b32.xlu0 %v1082, 127
      %v1219 = vpop.permute.xlu0 %1218
      %1220 = vrot.lane.b32.xlu0 %v1077, 127
      %v1221 = vpop.permute.xlu0 %1220
      %1222 = vrot.lane.b32.xlu0 %v1079, 127
      %v1223 = vpop.permute.xlu0 %1222
      %1224 = vrot.lane.b32.xlu0 %v1081, 127
      %v1225 = vpop.permute.xlu0 %1224
      %1226 = vrot.lane.b32.xlu0 %v1083, 127
      %v1227 = vpop.permute.xlu0 %1226
      %v1228 = vsel %vm410, %v1213, %v1221
      %v1229 = vsel %vm410, %v1215, %v1223
      %v1230 = vsel %vm410, %v1217, %v1225
      %v1231 = vsel %vm410, %v1219, %v1227
      %v1232 = vsel %vm410, %v1221, %v1213
      %v1233 = vsel %vm410, %v1223, %v1215
      %v1234 = vsel %vm410, %v1225, %v1217
      %v1235 = vsel %vm410, %v1227, %v1219
      %v1236 = vmul.f32 %v1228, %v417
      %v1237 = vmul.f32 %v1232, %v421
      %v1238 = vmul.f32 %v1229, %v417
      %v1239 = vmul.f32 %v1233, %v421
      %v1240 = vmul.f32 %v1230, %v417
      %v1241 = vmul.f32 %v1234, %v421
      %v1242 = vmul.f32 %v1231, %v417
      %v1243 = vmul.f32 %v1235, %v421
      %1244 = vrot.lane.b32.xlu0 %v1076, 113
      %v1245 = vpop.permute.xlu0 %1244
      %1246 = vrot.lane.b32.xlu0 %v1078, 113
      %v1247 = vpop.permute.xlu0 %1246
      %1248 = vrot.lane.b32.xlu0 %v1080, 113
      %v1249 = vpop.permute.xlu0 %1248
      %1250 = vrot.lane.b32.xlu0 %v1082, 113
      %v1251 = vpop.permute.xlu0 %1250
      %1252 = vrot.lane.b32.xlu0 %v1077, 113
      %v1253 = vpop.permute.xlu0 %1252
      %1254 = vrot.lane.b32.xlu0 %v1079, 113
      %v1255 = vpop.permute.xlu0 %1254
      %1256 = vrot.lane.b32.xlu0 %v1081, 113
      %v1257 = vpop.permute.xlu0 %1256
      %1258 = vrot.lane.b32.xlu0 %v1083, 113
      %v1259 = vpop.permute.xlu0 %1258
      %v1260 = vsel %vm430, %v1245, %v1253
      %v1261 = vsel %vm430, %v1247, %v1255
      %v1262 = vsel %vm430, %v1249, %v1257
      %v1263 = vsel %vm430, %v1251, %v1259
      %v1264 = vsel %vm430, %v1253, %v1245
      %v1265 = vsel %vm430, %v1255, %v1247
      %v1266 = vsel %vm430, %v1257, %v1249
      %v1267 = vsel %vm430, %v1259, %v1251
      %v1268 = vmul.f32 %v1260, %v437
      %v1269 = vmul.f32 %v1264, %v441
      %v1270 = vmul.f32 %v1261, %v437
      %v1271 = vmul.f32 %v1265, %v441
      %v1272 = vmul.f32 %v1262, %v437
      %v1273 = vmul.f32 %v1266, %v441
      %v1274 = vmul.f32 %v1263, %v437
      %v1275 = vmul.f32 %v1267, %v441
      %1276 = vrot.lane.b32.xlu0 %v1076, 112
      %v1277 = vpop.permute.xlu0 %1276
      %1278 = vrot.lane.b32.xlu0 %v1078, 112
      %v1279 = vpop.permute.xlu0 %1278
      %1280 = vrot.lane.b32.xlu0 %v1080, 112
      %v1281 = vpop.permute.xlu0 %1280
      %1282 = vrot.lane.b32.xlu0 %v1082, 112
      %v1283 = vpop.permute.xlu0 %1282
      %1284 = vrot.lane.b32.xlu0 %v1077, 112
      %v1285 = vpop.permute.xlu0 %1284
      %1286 = vrot.lane.b32.xlu0 %v1079, 112
      %v1287 = vpop.permute.xlu0 %1286
      %1288 = vrot.lane.b32.xlu0 %v1081, 112
      %v1289 = vpop.permute.xlu0 %1288
      %1290 = vrot.lane.b32.xlu0 %v1083, 112
      %v1291 = vpop.permute.xlu0 %1290
      %v1292 = vsel %vm450, %v1277, %v1285
      %v1293 = vsel %vm450, %v1279, %v1287
      %v1294 = vsel %vm450, %v1281, %v1289
      %v1295 = vsel %vm450, %v1283, %v1291
      %v1296 = vsel %vm450, %v1285, %v1277
      %v1297 = vsel %vm450, %v1287, %v1279
      %v1298 = vsel %vm450, %v1289, %v1281
      %v1299 = vsel %vm450, %v1291, %v1283
      %v1300 = vmul.f32 %v1292, %v457
      %v1301 = vmul.f32 %v1296, %v461
      %v1302 = vmul.f32 %v1293, %v457
      %v1303 = vmul.f32 %v1297, %v461
      %v1304 = vmul.f32 %v1294, %v457
      %v1305 = vmul.f32 %v1298, %v461
      %v1306 = vmul.f32 %v1295, %v457
      %v1307 = vmul.f32 %v1299, %v461
      %1308 = vrot.lane.b32.xlu0 %v1076, 111
      %v1309 = vpop.permute.xlu0 %1308
      %1310 = vrot.lane.b32.xlu0 %v1078, 111
      %v1311 = vpop.permute.xlu0 %1310
      %1312 = vrot.lane.b32.xlu0 %v1080, 111
      %v1313 = vpop.permute.xlu0 %1312
      %1314 = vrot.lane.b32.xlu0 %v1082, 111
      %v1315 = vpop.permute.xlu0 %1314
      %1316 = vrot.lane.b32.xlu0 %v1077, 111
      %v1317 = vpop.permute.xlu0 %1316
      %1318 = vrot.lane.b32.xlu0 %v1079, 111
      %v1319 = vpop.permute.xlu0 %1318
      %1320 = vrot.lane.b32.xlu0 %v1081, 111
      %v1321 = vpop.permute.xlu0 %1320
      %1322 = vrot.lane.b32.xlu0 %v1083, 111
      %v1323 = vpop.permute.xlu0 %1322
      %v1324 = vsel %vm470, %v1309, %v1317
      %v1325 = vsel %vm470, %v1311, %v1319
      %v1326 = vsel %vm470, %v1313, %v1321
      %v1327 = vsel %vm470, %v1315, %v1323
      %v1328 = vsel %vm470, %v1317, %v1309
      %v1329 = vsel %vm470, %v1319, %v1311
      %v1330 = vsel %vm470, %v1321, %v1313
      %v1331 = vsel %vm470, %v1323, %v1315
      %v1332 = vmul.f32 %v1324, %v477
      %v1333 = vmul.f32 %v1328, %v481
      %v1334 = vmul.f32 %v1325, %v477
      %v1335 = vmul.f32 %v1329, %v481
      %v1336 = vmul.f32 %v1326, %v477
      %v1337 = vmul.f32 %v1330, %v481
      %v1338 = vmul.f32 %v1327, %v477
      %v1339 = vmul.f32 %v1331, %v481
      %v1340 = vpack.c.bf16 %v1110, %v1108
      %v1341 = vpack.c.bf16 %v1111, %v1109
      %v1342 = vpack.c.bf16 %v1114, %v1112
      %v1343 = vpack.c.bf16 %v1115, %v1113
      %v1344 = vpack.c.bf16 %v1142, %v1140
      %v1345 = vpack.c.bf16 %v1143, %v1141
      %v1346 = vpack.c.bf16 %v1146, %v1144
      %v1347 = vpack.c.bf16 %v1147, %v1145
      %v1348 = vpack.c.bf16 %v1174, %v1172
      %v1349 = vpack.c.bf16 %v1175, %v1173
      %v1350 = vpack.c.bf16 %v1178, %v1176
      %v1351 = vpack.c.bf16 %v1179, %v1177
      %v1352 = vpack.c.bf16 %v1206, %v1204
      %v1353 = vpack.c.bf16 %v1207, %v1205
      %v1354 = vpack.c.bf16 %v1210, %v1208
      %v1355 = vpack.c.bf16 %v1211, %v1209
      %v1356 = vpack.c.bf16 %v1078, %v1076
      %v1357 = vpack.c.bf16 %v1079, %v1077
      %v1358 = vpack.c.bf16 %v1082, %v1080
      %v1359 = vpack.c.bf16 %v1083, %v1081
      %v1360 = vpack.c.bf16 %v1238, %v1236
      %v1361 = vpack.c.bf16 %v1239, %v1237
      %v1362 = vpack.c.bf16 %v1242, %v1240
      %v1363 = vpack.c.bf16 %v1243, %v1241
      %v1364 = vpack.c.bf16 %v1270, %v1268
      %v1365 = vpack.c.bf16 %v1271, %v1269
      %v1366 = vpack.c.bf16 %v1274, %v1272
      %v1367 = vpack.c.bf16 %v1275, %v1273
      %v1368 = vpack.c.bf16 %v1302, %v1300
      %v1369 = vpack.c.bf16 %v1303, %v1301
      %v1370 = vpack.c.bf16 %v1306, %v1304
      %v1371 = vpack.c.bf16 %v1307, %v1305
      %v1372 = vpack.c.bf16 %v1334, %v1332
      %v1373 = vpack.c.bf16 %v1335, %v1333
      %v1374 = vpack.c.bf16 %v1338, %v1336
      %v1375 = vpack.c.bf16 %v1339, %v1337
      %v1376 = vld [vmem:[%s6] sm:$0xff]
      %v1377 = vld [vmem:[%s6 + $0x8] sm:$0xf]
      %v1378 = vld [vmem:[%s7] sm:$0xff]
      %1380 = vset.pattern.permute.xlu0 0
      %1381 = vperm.xlu0 %1380, %v1378
      %v1382 = vpop.permute.xlu0 %1381
      %v1386 = vunpack.c.l.b16 %v1376
      %v1387 = vunpack.c.h.b16 %v1376
      %v1388 = vunpack.c.l.b16 %v1377
      %v1389 = vpack.c.b16 %v1386, %v1386
      %v1390 = vpack.c.b16 %v1387, %v1387
      %v1391 = vpack.c.b16 %v1388, %v1388
      %v1395 = vsel %vm963, %v1391, 0
      %1397 = vmatprep.subr.bf16.mxu0 %v1341
      %1398 = vmatpush1.bf16.msra.mxu0 %v1340
      %1399 = vmatprep.subr.bf16.mxu0 %v1343
      %1400 = vmatpush1.bf16.msra.mxu0 %v1342
      %1401 = vmatprep.subr.bf16.mxu0 %v1345
      %1402 = vmatpush1.bf16.msra.mxu0 %v1344
      %1403 = vmatprep.subr.bf16.mxu0 %v1347
      %1404 = vmatpush1.bf16.msra.mxu0 %v1346
      %1405 = vmatprep.subr.bf16.mxu0 %v1349
      %1406 = vmatpush1.bf16.msra.mxu0 %v1348
      %1407 = vmatprep.subr.bf16.mxu0 %v1351
      %1408 = vmatpush1.bf16.msra.mxu0 %v1350
      %1409 = vmatprep.subr.bf16.mxu0 %v1353
      %1410 = vmatpush1.bf16.msra.mxu0 %v1352
      %1411 = vmatprep.subr.bf16.mxu0 %v1355
      %1412 = vmatpush1.bf16.msra.mxu0 %v1354
      %1413 = vmatprep.subr.bf16.mxu0 %v1357
      %1414 = vmatpush1.bf16.msra.mxu0 %v1356
      %1415 = vmatprep.subr.bf16.mxu0 %v1359
      %1416 = vmatpush1.bf16.msra.mxu0 %v1358
      %1417 = vmatprep.subr.bf16.mxu0 %v1361
      %1418 = vmatpush1.bf16.msra.mxu0 %v1360
      %1419 = vmatprep.subr.bf16.mxu0 %v1363
      %1420 = vmatpush1.bf16.msra.mxu0 %v1362
      %1421 = vmatprep.subr.bf16.mxu0 %v1365
      %1422 = vmatpush1.bf16.msra.mxu0 %v1364
      %1423 = vmatprep.subr.bf16.mxu0 %v1367
      %1424 = vmatpush1.bf16.msra.mxu0 %v1366
      %1425 = vmatprep.subr.bf16.mxu0 %v1369
      %1426 = vmatpush1.bf16.msra.mxu0 %v1368
      %1427 = vmatprep.subr.bf16.mxu0 %v1371
      %1428 = vmatpush1.bf16.msra.mxu0 %v1370
      %1429 = vmatprep.mubr.bf16.mxu0 %v1390
      %1430 = vmatmul.mubr.bf16.gmra.mrb[0].mxu0 %v1389
      %v1431 = vpop.f32.mrb[0].mxu0
      %v1432 = vadd.f32 %v1382, %v1431
      %v1433 = vpop.f32.mrb[0].mxu0
      %v1434 = vadd.f32 %v1382, %v1433
      %v1435 = vpop.f32.mrb[0].mxu0
      %v1436 = vpop.f32.mrb[0].mxu0
      %1437 = vdwg.mxu0
      %1438 = vmatprep.subr.bf16.mxu0 %v1373
      %1439 = vmatpush1.bf16.msra.mxu0 %v1372
      %1440 = vmatprep.subr.bf16.mxu0 %v1375
      %1441 = vmatpush1.bf16.msra.mxu0 %v1374
      %1442 = vmatprep.subr.bf16.mxu0 0
      %1443 = vmatpush1.bf16.msra.mxu0 0
      %1444 = vmatprep.subr.bf16.mxu0 0
      %1445 = vmatpush1.bf16.msra.mxu0 0
      %1446 = vmatprep.subr.bf16.mxu0 0
      %1447 = vmatpush1.bf16.msra.mxu0 0
      %1448 = vmatprep.subr.bf16.mxu0 0
      %1449 = vmatpush1.bf16.msra.mxu0 0
      %1450 = vmatprep.subr.bf16.mxu0 0
      %1451 = vmatpush1.bf16.msra.mxu0 0
      %1452 = vmatprep.subr.bf16.mxu0 0
      %1453 = vmatpush1.bf16.msra.mxu0 0
      %1454 = vmatprep.subr.bf16.mxu0 0
      %1455 = vmatpush1.bf16.msra.mxu0 0
      %1456 = vmatprep.subr.bf16.mxu0 0
      %1457 = vmatpush1.bf16.msra.mxu0 0
      %1458 = vmatprep.subr.bf16.mxu0 0
      %1459 = vmatpush1.bf16.msra.mxu0 0
      %1460 = vmatprep.subr.bf16.mxu0 0
      %1461 = vmatpush1.bf16.msra.mxu0 0
      %1462 = vmatprep.subr.bf16.mxu0 0
      %1463 = vmatpush1.bf16.msra.mxu0 0
      %1464 = vmatprep.subr.bf16.mxu0 0
      %1465 = vmatpush1.bf16.msra.mxu0 0
      %1466 = vmatprep.subr.bf16.mxu0 0
      %1467 = vmatpush1.bf16.msra.mxu0 0
      %1468 = vmatprep.subr.bf16.mxu0 0
      %1469 = vmatpush1.bf16.msra.mxu0 0
      %1470 = vmatprep.mubr.bf16.mxu0 0
      %1471 = vmatmul.mubr.bf16.gmra.mrb[0].mxu0 %v1395
      %v1472 = vpop.f32.mrb[0].mxu0
      %v1473 = vadd.f32 %v1432, %v1472
      %v1474 = vpop.f32.mrb[0].mxu0
      %v1475 = vadd.f32 %v1434, %v1474
      %v1476 = vpop.f32.mrb[0].mxu0
      %v1477 = vpop.f32.mrb[0].mxu0
      %1478 = vdwg.mxu0
      %v1479 = vadd.f32 %v1473, %v322
      %v1480 = vadd.f32 %v1475, %v323
      %1481 = vst [vmem:[%s305] sm:$0xff] %v1479
      %1482 = vst [vmem:[%s305 + $0x8] sm:$0xff] %v1480
      %p1483 = scmp.lt.s32.totalorder %s19, 1
      %s1484 = scalar_select %p1483, %s19, 1
      %s1485 = smul.addr %s1484, 2
      %s1486 = smul.addr %s1485, 8
      %s1487 = scalar_lea.vmem %s8, %s1486
      // Predicated region
      $region53: #{shnet_forward.1} parent=51 // pred_check
        %p1488 = pneg %p210
      $region54: #{shnet_forward.1} parent=51 // pred_check_branch
        %1490 = sbr.rel (%p1488) target = $region56
      $region55: #{shnet_forward.1} parent=51 // pred_region
        _
      $region56: #{shnet_forward.1} parent=51 // pred_fallthru
        _
    $region52: #{shnet_forward.1} parent=5 // pred_fallthru
      _
    %p1491 = scmp.le.s32.totalorder 2, %s14
    // Predicated region
    $region57: #{shnet_forward.1} parent=5 // pred_check
      %p1492 = pneg %p1491
    $region58: #{shnet_forward.1} parent=5 // pred_check_branch
      %1494 = sbr.rel (%p1492) target = $region60
    $region59: #{shnet_forward.1} parent=5 // pred_region
      %s1495 = ssub.s32 %s14, 2
      // Predicated region
      $region61: #{shnet_forward.1} parent=59 // pred_check
        %p1496 = pneg %p216
      $region62: #{shnet_forward.1} parent=59 // pred_check_branch
        %1498 = sbr.rel (%p1496) target = $region64
      $region63: #{shnet_forward.1} parent=59 // pred_region
        %p1499 = scmp.lt.s32.totalorder %s20, 1
        %s1500 = scalar_select %p1499, %s20, 1
        %s1501 = smul.addr %s1500, 2
        %s1502 = smul.addr %s1501, 8
        %s1503 = scalar_lea.vmem %s8, %s1502
      $region64: #{shnet_forward.1} parent=59 // pred_fallthru
        _
    $region60: #{shnet_forward.1} parent=5 // pred_fallthru
      _
  $region6: #{shnet_forward.1} parent=0 // loop_footer
    %s18 = sadd.s32 1, %s14
  $region7: #{shnet_forward.1} parent=0 // loop_footer_branch
    %13 = sbr.rel target = $region3
  $region8: #{shnet_forward.1} parent=0 // loop_exit
    _

</llo_original>
